<compile_context>
chip_gen: v6e
topology: v6e:2x2x1
jax: 0.10.0
libtpu: 0.0.40
codegen_flags: <defaults>
</compile_context>

<pallas_src>
import functools

import jax
import jax.numpy as jnp
from jax.experimental import pallas as pl
from jax.experimental.pallas import tpu as pltpu


def _round_up(x, m):
    return (x + m - 1) // m * m


def _vmem_cap_bytes():
    # Physical VMEM per TensorCore (64 MiB on v7x, 128 MiB on v5e/v6e) minus headroom.
    try:
        cap = int(pltpu.get_tpu_info().vmem_capacity_bytes)
    except Exception:
        cap = 64 << 20
    return max(cap - (16 << 20), 16 << 20)


# ----------------------------------------------------------------------------
# Fast-path kernel: taps streamed from the padded image resident in VMEM.
# ----------------------------------------------------------------------------
def _image_kernel(w_ref, s_ref, x_ref, o_ref, *, tap_offsets, l_out, res_offset):
    # x_ref: (1, cinp, Lp) bf16 -- one padded image, flattened rows, read once
    # w_ref: (KH*KW, coutp, cinp) bf16 (BN scale folded in)
    # s_ref: (coutp, 1) f32 BN shift (+ conv bias)
    acc = None
    for t, off in enumerate(tap_offsets):          # static unroll over KH*KW taps
        part = jnp.dot(w_ref[t], x_ref[0, :, off:off + l_out],
                       preferred_element_type=jnp.float32)
        acc = part if acc is None else acc + part
    y = acc + s_ref[...]
    if res_offset is not None:
        # residual == the input window centred on the output position (bf16-rounded)
        y = y + x_ref[0, :, res_offset:res_offset + l_out].astype(jnp.float32)
    o_ref[0] = jnp.maximum(y, 0.0).astype(o_ref.dtype)


# ----------------------------------------------------------------------------
# Fallback kernel: blocked im2col matmul + fused BN shift / residual / ReLU.
# ----------------------------------------------------------------------------
def _im2col_kernel(w_ref, s_ref, p_ref, o_ref, *, center_row, n_res_rows):
    acc = jnp.dot(w_ref[...], p_ref[...], preferred_element_type=jnp.float32)
    y = acc + s_ref[...]
    if center_row is not None:
        y = y + p_ref[center_row:center_row + n_res_rows, :].astype(jnp.float32)
    o_ref[...] = jnp.maximum(y, 0.0).astype(o_ref.dtype)


# ----------------------------------------------------------------------------
# Wrapper
# ----------------------------------------------------------------------------
def conv2d_bn_relu(x, weight, bias, gamma, beta, running_mean, running_var,
                   *, stride, padding, residual, eps=1e-5, tm=1024,
                   out_dtype=jnp.float32):
    """Forward pass of the Conv2d block.  x: (N, Cin, H, W) float32 NCHW."""
    N, Cin, H, W = x.shape
    Cout, _, KH, KW = weight.shape
    Hout = (H + 2 * padding - KH) // stride + 1
    Wout = (W + 2 * padding - KW) // stride + 1
    assert Hout > 0 and Wout > 0

    cinp = _round_up(Cin, 16)      # bf16 packs (16,128)/vreg -> 16-align channels
    coutp = _round_up(Cout, 16)
    T = KH * KW

    if residual:
        assert Cout == Cin and Hout == H and Wout == W, \
            "residual add requires matching input/output shapes"

    # Fold conv bias + inference BatchNorm into the weights / a per-channel shift.
    # TODO(synk): training-mode BatchNorm (batch statistics + running-stat update)
    #             is not implemented; this is the eval-form forward.
    scale = (gamma / jnp.sqrt(running_var + eps)).astype(jnp.float32)
    shift = ((bias - running_mean) * scale + beta).astype(jnp.float32)
    w_scaled = weight.astype(jnp.float32) * scale[:, None, None, None]
    shift_p = jnp.pad(shift, (0, coutp - Cout)).reshape(coutp, 1)

    out_bytes = jnp.dtype(out_dtype).itemsize
    vmem_cap = _vmem_cap_bytes()

    # ---------------- fast path: stream taps from the padded image ------------
    fast_ok = False
    if stride == 1:
        Hp, Wp = H + 2 * padding, W + 2 * padding
        l_out = _round_up(Hout * Wp, 128)                  # lane-dense wide output
        max_off = (KH - 1) * Wp + (KW - 1)
        Lp = _round_up(max(Hp * Wp, max_off + l_out), 128)
        # double-buffered blocks + in-kernel temporaries (generous estimate)
        need = (2 * cinp * Lp * 2 + 2 * coutp * l_out * out_bytes
                + 2 * T * coutp * cinp * 2
                + 4 * cinp * l_out * 2 + 3 * coutp * l_out * 4)
        fast_ok = need <= (vmem_cap * 3) // 4

    if fast_ok:
        # (N, cinp, Lp) bf16: cast FIRST, then pad (minimises prep HBM traffic).
        xb = x.astype(jnp.bfloat16)
        xp = jnp.pad(xb, ((0, 0), (0, cinp - Cin),
                          (padding, padding), (padding, padding)))
        xflat = xp.reshape(N, cinp, Hp * Wp)
        xflat = jnp.pad(xflat, ((0, 0), (0, 0), (0, Lp - Hp * Wp)))

        w_t = jnp.transpose(w_scaled, (2, 3, 0, 1))        # (KH, KW, Cout, Cin)
        w_t = jnp.pad(w_t, ((0, 0), (0, 0), (0, coutp - Cout), (0, cinp - Cin)))
        w_t = w_t.reshape(T, coutp, cinp).astype(jnp.bfloat16)

        tap_offsets = tuple(kh * Wp + kw for kh in range(KH) for kw in range(KW))
        res_offset = padding * Wp + padding if residual else None

        kernel = functools.partial(_image_kernel, tap_offsets=tap_offsets,
                                   l_out=l_out, res_offset=res_offset)
        cost = pl.CostEstimate(
            flops=2 * N * T * coutp * cinp * l_out,
            transcendentals=0,
            bytes_accessed=int(N * cinp * Lp * 2 + N * coutp * l_out * out_bytes
                               + T * coutp * cinp * 2 + coutp * 4))
        vmem_limit = int(min(max(2 * need + (8 << 20), 16 << 20), vmem_cap))

        out_wide = pl.pallas_call(
            kernel,
            out_shape=jax.ShapeDtypeStruct((N, coutp, l_out), out_dtype),
            grid_spec=pltpu.PrefetchScalarGridSpec(
                num_scalar_prefetch=0, grid=(N,),
                in_specs=[pl.BlockSpec((T, coutp, cinp), lambda n: (0, 0, 0)),
                          pl.BlockSpec((coutp, 1), lambda n: (0, 0)),
                          pl.BlockSpec((1, cinp, Lp), lambda n: (n, 0, 0))],
                out_specs=pl.BlockSpec((1, coutp, l_out), lambda n: (n, 0, 0))),
            compiler_params=pltpu.CompilerParams(
                dimension_semantics=("parallel",),
                vmem_limit_bytes=vmem_limit),
            cost_estimate=cost,
        )(w_t, shift_p, xflat)

        # wide (Hout, Wp) rows -> valid (Hout, Wout) columns, drop channel pad
        out = out_wide[:, :Cout, :Hout * Wp].reshape(N, Cout, Hout, Wp)
        return out[:, :, :, :Wout]

    # ---------------- fallback: blocked im2col matmul --------------------------
    K = T * cinp
    M = N * Hout * Wout
    tm_ = max(128, min(tm, _round_up(M, 128)))
    if M > 128:                            # keep >= 2 grid steps (v7x megacore)
        tm_ = min(tm_, _round_up(pl.cdiv(M, 2), 128))
    tm_ = _round_up(tm_, 128)
    Mp = _round_up(M, tm_)

    # Channel-major layout, bf16 cast BEFORE the tap slices/stack (2x less prep IO).
    x_cp = jnp.transpose(x, (1, 0, 2, 3)).astype(jnp.bfloat16)      # (Cin,N,H,W)
    x_cp = jnp.pad(x_cp, ((0, cinp - Cin), (0, 0),
                          (padding, padding), (padding, padding)))
    taps = [x_cp[:, :, kh:kh + Hout * stride:stride, kw:kw + Wout * stride:stride]
            for kh in range(KH) for kw in range(KW)]
    patches = jnp.stack(taps, axis=0).reshape(K, M)                 # (K, M) bf16
    if Mp != M:
        patches = jnp.pad(patches, ((0, 0), (0, Mp - M)))

    w_t = jnp.transpose(w_scaled, (0, 2, 3, 1))                     # (Cout,KH,KW,Cin)
    w_t = jnp.pad(w_t, ((0, coutp - Cout), (0, 0), (0, 0), (0, cinp - Cin)))
    w_t = w_t.reshape(coutp, K).astype(jnp.bfloat16)                # (coutp, K)

    center_row = None
    if residual:
        # shape-matching with stride 1 implies an odd 'same' kernel -> residual is
        # exactly the center tap of the im2col rows (16-aligned since cinp % 16 == 0)
        assert (stride == 1 and KH % 2 == 1 and KW % 2 == 1
                and padding == KH // 2 and padding == KW // 2)
        center_row = (KH // 2 * KW + KW // 2) * cinp

    kernel = functools.partial(_im2col_kernel, center_row=center_row,
                               n_res_rows=coutp)
    stage = (2 * K * tm_ * 2 + 2 * coutp * tm_ * out_bytes
             + 2 * coutp * K * 2 + 2 * coutp * tm_ * 4 + coutp * 4)
    vmem_limit = int(min(max(2 * stage + (8 << 20), 16 << 20), vmem_cap))
    cost = pl.CostEstimate(
        flops=2 * coutp * K * Mp, transcendentals=0,
        bytes_accessed=int(K * Mp * 2 + coutp * Mp * out_bytes + coutp * K * 2))

    out_t = pl.pallas_call(
        kernel,
        out_shape=jax.ShapeDtypeStruct((coutp, Mp), out_dtype),
        grid_spec=pltpu.PrefetchScalarGridSpec(
            num_scalar_prefetch=0, grid=(Mp // tm_,),
            in_specs=[pl.BlockSpec((coutp, K), lambda i: (0, 0)),
                      pl.BlockSpec((coutp, 1), lambda i: (0, 0)),
                      pl.BlockSpec((K, tm_), lambda i: (0, i))],
            out_specs=pl.BlockSpec((coutp, tm_), lambda i: (0, i))),
        compiler_params=pltpu.CompilerParams(
            dimension_semantics=("parallel",),
            vmem_limit_bytes=vmem_limit),
        cost_estimate=cost,
    )(w_t, shift_p, patches)

    out = out_t[:Cout, :M].reshape(Cout, N, Hout, Wout)
    return jnp.transpose(out, (1, 0, 2, 3))


# ----------------------------------------------------------------------------
# Reference (pure XLA) for correctness checking
# ----------------------------------------------------------------------------
def _reference(x, weight, bias, gamma, beta, mean, var, *, stride, padding,
               residual, eps=1e-5):
    y = jax.lax.conv_general_dilated(
        x, weight, window_strides=(stride, stride),
        padding=[(padding, padding), (padding, padding)],
        dimension_numbers=("NCHW", "OIHW", "NCHW"))
    y = y + bias[None, :, None, None]
    y = (y - mean[None, :, None, None]) / jnp.sqrt(var[None, :, None, None] + eps)
    y = y * gamma[None, :, None, None] + beta[None, :, None, None]
    if residual:
        y = y + x
    return jnp.maximum(y, 0.0)


if __name__ == "__main__":
    key = jax.random.PRNGKey(0)
    k_x, k_w, k_b, k_g, k_be, k_m, k_v = jax.random.split(key, 7)

    N, Cin, H, W = 2, 4, 16, 16
    Cout, KH, KW = 4, 3, 3

    x = jax.random.normal(k_x, (N, Cin, H, W), jnp.float32)
    weight = jax.random.normal(k_w, (Cout, Cin, KH, KW), jnp.float32) * 0.1
    bias = jax.random.normal(k_b, (Cout,), jnp.float32) * 0.1
    gamma = 1.0 + 0.1 * jax.random.normal(k_g, (Cout,), jnp.float32)
    beta = 0.1 * jax.random.normal(k_be, (Cout,), jnp.float32)
    running_mean = 0.1 * jax.random.normal(k_m, (Cout,), jnp.float32)
    running_var = jax.random.uniform(k_v, (Cout,), jnp.float32, 0.5, 1.5)

    # 1) stride-1 'same' residual block -> tap-streaming fast path
    fn1 = jax.jit(functools.partial(conv2d_bn_relu, stride=1, padding=1,
                                    residual=True))
    out1 = jax.block_until_ready(
        fn1(x, weight, bias, gamma, beta, running_mean, running_var))
    ref1 = _reference(x, weight, bias, gamma, beta, running_mean, running_var,
                      stride=1, padding=1, residual=True)
    assert out1.shape == (N, Cout, H, W)
    err1 = float(jnp.max(jnp.abs(out1 - ref1)))
    assert jnp.allclose(out1, ref1, atol=5e-2, rtol=5e-2), f"fast path err {err1}"

    # 2) stride-2 downsampling block -> blocked im2col fallback path
    fn2 = jax.jit(functools.partial(conv2d_bn_relu, stride=2, padding=1,
                                    residual=False))
    out2 = jax.block_until_ready(
        fn2(x, weight, bias, gamma, beta, running_mean, running_var))
    ref2 = _reference(x, weight, bias, gamma, beta, running_mean, running_var,
                      stride=2, padding=1, residual=False)
    assert out2.shape == ref2.shape
    err2 = float(jnp.max(jnp.abs(out2 - ref2)))
    assert jnp.allclose(out2, ref2, atol=5e-2, rtol=5e-2), f"fallback err {err2}"

    print("KERNEL_OK")
</pallas_src>

<mosaic_0001>
module attributes {stable_mosaic.version = 11 : i64} {
  func.func @_image_kernel(%arg0: i32, %arg1: memref<9x16x16xbf16, #tpu.memory_space<vmem>>, %arg2: memref<16x1xf32, #tpu.memory_space<vmem>>, %arg3: memref<1x16x512xbf16, #tpu.memory_space<vmem>>, %arg4: memref<1x16x384xf32, #tpu.memory_space<vmem>>) attributes {dimension_semantics = [#tpu.dimension_semantics<parallel>], iteration_bounds = array<i64: 2>, scalar_prefetch = 0 : i64, scratch_operands = 0 : i64, tpu.core_type = #tpu.core_type<tc>, window_params = [{pipeline_mode = #tpu.pipeline_mode<synchronous>, transform_indices = @transform_0, window_bounds = array<i64: 9, 16, 16>}, {pipeline_mode = #tpu.pipeline_mode<synchronous>, transform_indices = @transform_1, window_bounds = array<i64: 16, 1>}, {transform_indices = @transform_2, window_bounds = array<i64: 1, 16, 512>}, {transform_indices = @transform_3, window_bounds = array<i64: 1, 16, 384>}]} {
    %c0 = arith.constant 0 : index
    %c0_0 = arith.constant 0 : index
    %c0_1 = arith.constant 0 : index
    %0 = vector.load %arg1[%c0, %c0_0, %c0_1] : memref<9x16x16xbf16, #tpu.memory_space<vmem>>, vector<1x16x16xbf16>
    %1 = vector.shape_cast %0 : vector<1x16x16xbf16> to vector<16x16xbf16>
    %c0_2 = arith.constant 0 : index
    %c0_3 = arith.constant 0 : index
    %c0_4 = arith.constant 0 : index
    %2 = vector.load %arg3[%c0_2, %c0_3, %c0_4] : memref<1x16x512xbf16, #tpu.memory_space<vmem>>, vector<1x16x384xbf16>
    %3 = vector.shape_cast %2 : vector<1x16x384xbf16> to vector<16x384xbf16>
    %cst = arith.constant dense<0.000000e+00> : vector<16x384xf32>
    %4 = tpu.matmul %1, %3, %cst {dimension_numbers = #tpu.dot_dimension_numbers<[1], [0], [0], [1], [0, 0, 1, 1], [], []>} : vector<16x16xbf16>, vector<16x384xbf16>, vector<16x384xf32> -> vector<16x384xf32>
    %c1 = arith.constant 1 : index
    %c0_5 = arith.constant 0 : index
    %c0_6 = arith.constant 0 : index
    %5 = vector.load %arg1[%c1, %c0_5, %c0_6] : memref<9x16x16xbf16, #tpu.memory_space<vmem>>, vector<1x16x16xbf16>
    %6 = vector.shape_cast %5 : vector<1x16x16xbf16> to vector<16x16xbf16>
    %c0_7 = arith.constant 0 : index
    %c0_8 = arith.constant 0 : index
    %c1_9 = arith.constant 1 : index
    %7 = vector.load %arg3[%c0_7, %c0_8, %c1_9] : memref<1x16x512xbf16, #tpu.memory_space<vmem>>, vector<1x16x384xbf16>
    %8 = vector.shape_cast %7 : vector<1x16x384xbf16> to vector<16x384xbf16>
    %cst_10 = arith.constant dense<0.000000e+00> : vector<16x384xf32>
    %9 = tpu.matmul %6, %8, %cst_10 {dimension_numbers = #tpu.dot_dimension_numbers<[1], [0], [0], [1], [0, 0, 1, 1], [], []>} : vector<16x16xbf16>, vector<16x384xbf16>, vector<16x384xf32> -> vector<16x384xf32>
    %10 = arith.addf %4, %9 : vector<16x384xf32>
    %c2 = arith.constant 2 : index
    %c0_11 = arith.constant 0 : index
    %c0_12 = arith.constant 0 : index
    %11 = vector.load %arg1[%c2, %c0_11, %c0_12] : memref<9x16x16xbf16, #tpu.memory_space<vmem>>, vector<1x16x16xbf16>
    %12 = vector.shape_cast %11 : vector<1x16x16xbf16> to vector<16x16xbf16>
    %c0_13 = arith.constant 0 : index
    %c0_14 = arith.constant 0 : index
    %c2_15 = arith.constant 2 : index
    %13 = vector.load %arg3[%c0_13, %c0_14, %c2_15] : memref<1x16x512xbf16, #tpu.memory_space<vmem>>, vector<1x16x384xbf16>
    %14 = vector.shape_cast %13 : vector<1x16x384xbf16> to vector<16x384xbf16>
    %cst_16 = arith.constant dense<0.000000e+00> : vector<16x384xf32>
    %15 = tpu.matmul %12, %14, %cst_16 {dimension_numbers = #tpu.dot_dimension_numbers<[1], [0], [0], [1], [0, 0, 1, 1], [], []>} : vector<16x16xbf16>, vector<16x384xbf16>, vector<16x384xf32> -> vector<16x384xf32>
    %16 = arith.addf %10, %15 : vector<16x384xf32>
    %c3 = arith.constant 3 : index
    %c0_17 = arith.constant 0 : index
    %c0_18 = arith.constant 0 : index
    %17 = vector.load %arg1[%c3, %c0_17, %c0_18] : memref<9x16x16xbf16, #tpu.memory_space<vmem>>, vector<1x16x16xbf16>
    %18 = vector.shape_cast %17 : vector<1x16x16xbf16> to vector<16x16xbf16>
    %c0_19 = arith.constant 0 : index
    %c0_20 = arith.constant 0 : index
    %c18 = arith.constant 18 : index
    %19 = vector.load %arg3[%c0_19, %c0_20, %c18] : memref<1x16x512xbf16, #tpu.memory_space<vmem>>, vector<1x16x384xbf16>
    %20 = vector.shape_cast %19 : vector<1x16x384xbf16> to vector<16x384xbf16>
    %cst_21 = arith.constant dense<0.000000e+00> : vector<16x384xf32>
    %21 = tpu.matmul %18, %20, %cst_21 {dimension_numbers = #tpu.dot_dimension_numbers<[1], [0], [0], [1], [0, 0, 1, 1], [], []>} : vector<16x16xbf16>, vector<16x384xbf16>, vector<16x384xf32> -> vector<16x384xf32>
    %22 = arith.addf %16, %21 : vector<16x384xf32>
    %c4 = arith.constant 4 : index
    %c0_22 = arith.constant 0 : index
    %c0_23 = arith.constant 0 : index
    %23 = vector.load %arg1[%c4, %c0_22, %c0_23] : memref<9x16x16xbf16, #tpu.memory_space<vmem>>, vector<1x16x16xbf16>
    %24 = vector.shape_cast %23 : vector<1x16x16xbf16> to vector<16x16xbf16>
    %c0_24 = arith.constant 0 : index
    %c0_25 = arith.constant 0 : index
    %c19 = arith.constant 19 : index
    %25 = vector.load %arg3[%c0_24, %c0_25, %c19] : memref<1x16x512xbf16, #tpu.memory_space<vmem>>, vector<1x16x384xbf16>
    %26 = vector.shape_cast %25 : vector<1x16x384xbf16> to vector<16x384xbf16>
    %cst_26 = arith.constant dense<0.000000e+00> : vector<16x384xf32>
    %27 = tpu.matmul %24, %26, %cst_26 {dimension_numbers = #tpu.dot_dimension_numbers<[1], [0], [0], [1], [0, 0, 1, 1], [], []>} : vector<16x16xbf16>, vector<16x384xbf16>, vector<16x384xf32> -> vector<16x384xf32>
    %28 = arith.addf %22, %27 : vector<16x384xf32>
    %c5 = arith.constant 5 : index
    %c0_27 = arith.constant 0 : index
    %c0_28 = arith.constant 0 : index
    %29 = vector.load %arg1[%c5, %c0_27, %c0_28] : memref<9x16x16xbf16, #tpu.memory_space<vmem>>, vector<1x16x16xbf16>
    %30 = vector.shape_cast %29 : vector<1x16x16xbf16> to vector<16x16xbf16>
    %c0_29 = arith.constant 0 : index
    %c0_30 = arith.constant 0 : index
    %c20 = arith.constant 20 : index
    %31 = vector.load %arg3[%c0_29, %c0_30, %c20] : memref<1x16x512xbf16, #tpu.memory_space<vmem>>, vector<1x16x384xbf16>
    %32 = vector.shape_cast %31 : vector<1x16x384xbf16> to vector<16x384xbf16>
    %cst_31 = arith.constant dense<0.000000e+00> : vector<16x384xf32>
    %33 = tpu.matmul %30, %32, %cst_31 {dimension_numbers = #tpu.dot_dimension_numbers<[1], [0], [0], [1], [0, 0, 1, 1], [], []>} : vector<16x16xbf16>, vector<16x384xbf16>, vector<16x384xf32> -> vector<16x384xf32>
    %34 = arith.addf %28, %33 : vector<16x384xf32>
    %c6 = arith.constant 6 : index
    %c0_32 = arith.constant 0 : index
    %c0_33 = arith.constant 0 : index
    %35 = vector.load %arg1[%c6, %c0_32, %c0_33] : memref<9x16x16xbf16, #tpu.memory_space<vmem>>, vector<1x16x16xbf16>
    %36 = vector.shape_cast %35 : vector<1x16x16xbf16> to vector<16x16xbf16>
    %c0_34 = arith.constant 0 : index
    %c0_35 = arith.constant 0 : index
    %c36 = arith.constant 36 : index
    %37 = vector.load %arg3[%c0_34, %c0_35, %c36] : memref<1x16x512xbf16, #tpu.memory_space<vmem>>, vector<1x16x384xbf16>
    %38 = vector.shape_cast %37 : vector<1x16x384xbf16> to vector<16x384xbf16>
    %cst_36 = arith.constant dense<0.000000e+00> : vector<16x384xf32>
    %39 = tpu.matmul %36, %38, %cst_36 {dimension_numbers = #tpu.dot_dimension_numbers<[1], [0], [0], [1], [0, 0, 1, 1], [], []>} : vector<16x16xbf16>, vector<16x384xbf16>, vector<16x384xf32> -> vector<16x384xf32>
    %40 = arith.addf %34, %39 : vector<16x384xf32>
    %c7 = arith.constant 7 : index
    %c0_37 = arith.constant 0 : index
    %c0_38 = arith.constant 0 : index
    %41 = vector.load %arg1[%c7, %c0_37, %c0_38] : memref<9x16x16xbf16, #tpu.memory_space<vmem>>, vector<1x16x16xbf16>
    %42 = vector.shape_cast %41 : vector<1x16x16xbf16> to vector<16x16xbf16>
    %c0_39 = arith.constant 0 : index
    %c0_40 = arith.constant 0 : index
    %c37 = arith.constant 37 : index
    %43 = vector.load %arg3[%c0_39, %c0_40, %c37] : memref<1x16x512xbf16, #tpu.memory_space<vmem>>, vector<1x16x384xbf16>
    %44 = vector.shape_cast %43 : vector<1x16x384xbf16> to vector<16x384xbf16>
    %cst_41 = arith.constant dense<0.000000e+00> : vector<16x384xf32>
    %45 = tpu.matmul %42, %44, %cst_41 {dimension_numbers = #tpu.dot_dimension_numbers<[1], [0], [0], [1], [0, 0, 1, 1], [], []>} : vector<16x16xbf16>, vector<16x384xbf16>, vector<16x384xf32> -> vector<16x384xf32>
    %46 = arith.addf %40, %45 : vector<16x384xf32>
    %c8 = arith.constant 8 : index
    %c0_42 = arith.constant 0 : index
    %c0_43 = arith.constant 0 : index
    %47 = vector.load %arg1[%c8, %c0_42, %c0_43] : memref<9x16x16xbf16, #tpu.memory_space<vmem>>, vector<1x16x16xbf16>
    %48 = vector.shape_cast %47 : vector<1x16x16xbf16> to vector<16x16xbf16>
    %c0_44 = arith.constant 0 : index
    %c0_45 = arith.constant 0 : index
    %c38 = arith.constant 38 : index
    %49 = vector.load %arg3[%c0_44, %c0_45, %c38] : memref<1x16x512xbf16, #tpu.memory_space<vmem>>, vector<1x16x384xbf16>
    %50 = vector.shape_cast %49 : vector<1x16x384xbf16> to vector<16x384xbf16>
    %cst_46 = arith.constant dense<0.000000e+00> : vector<16x384xf32>
    %51 = tpu.matmul %48, %50, %cst_46 {dimension_numbers = #tpu.dot_dimension_numbers<[1], [0], [0], [1], [0, 0, 1, 1], [], []>} : vector<16x16xbf16>, vector<16x384xbf16>, vector<16x384xf32> -> vector<16x384xf32>
    %52 = arith.addf %46, %51 : vector<16x384xf32>
    %c0_47 = arith.constant 0 : index
    %c0_48 = arith.constant 0 : index
    %53 = vector.load %arg2[%c0_47, %c0_48] : memref<16x1xf32, #tpu.memory_space<vmem>>, vector<16x1xf32>
    %54 = vector.broadcast %53 : vector<16x1xf32> to vector<16x384xf32>
    %55 = arith.addf %52, %54 : vector<16x384xf32>
    %c0_49 = arith.constant 0 : index
    %c0_50 = arith.constant 0 : index
    %c19_51 = arith.constant 19 : index
    %56 = vector.load %arg3[%c0_49, %c0_50, %c19_51] : memref<1x16x512xbf16, #tpu.memory_space<vmem>>, vector<1x16x384xbf16>
    %57 = vector.shape_cast %56 : vector<1x16x384xbf16> to vector<16x384xbf16>
    %58 = arith.extf %57 : vector<16x384xbf16> to vector<16x384xf32>
    %59 = arith.addf %55, %58 : vector<16x384xf32>
    %cst_52 = arith.constant 0.000000e+00 : f32
    %60 = vector.broadcast %cst_52 : f32 to vector<16x384xf32>
    %61 = arith.maximumf %59, %60 : vector<16x384xf32>
    %c0_53 = arith.constant 0 : index
    %c0_54 = arith.constant 0 : index
    %c0_55 = arith.constant 0 : index
    %62 = vector.load %arg4[%c0_53, %c0_54, %c0_55] : memref<1x16x384xf32, #tpu.memory_space<vmem>>, vector<1x16x384xf32>
    %63 = vector.shape_cast %62 : vector<1x16x384xf32> to vector<16x384xf32>
    %64 = vector.shape_cast %61 : vector<16x384xf32> to vector<1x16x384xf32>
    tpu.vector_store %arg4[%c0_53, %c0_54, %c0_55], %64 {strides = array<i32>} : memref<1x16x384xf32, #tpu.memory_space<vmem>>, vector<1x16x384xf32>,
    return
  }
  func.func @transform_0(%arg0: i32) -> (i32, i32, i32) {
    %c0_i32 = arith.constant 0 : i32
    %c0_i32_0 = arith.constant 0 : i32
    %c0_i32_1 = arith.constant 0 : i32
    %c0_i32_2 = arith.constant 0 : i32
    return %c0_i32, %c0_i32_0, %c0_i32_1 : i32, i32, i32
  }
  func.func @transform_1(%arg0: i32) -> (i32, i32) {
    %c0_i32 = arith.constant 0 : i32
    %c0_i32_0 = arith.constant 0 : i32
    %c0_i32_1 = arith.constant 0 : i32
    return %c0_i32, %c0_i32_0 : i32, i32
  }
  func.func @transform_2(%arg0: i32) -> (i32, i32, i32) {
    %c0_i32 = arith.constant 0 : i32
    %c0_i32_0 = arith.constant 0 : i32
    %c0_i32_1 = arith.constant 0 : i32
    return %arg0, %c0_i32, %c0_i32_0 : i32, i32, i32
  }
  func.func @transform_3(%arg0: i32) -> (i32, i32, i32) {
    %c0_i32 = arith.constant 0 : i32
    %c0_i32_0 = arith.constant 0 : i32
    %c0_i32_1 = arith.constant 0 : i32
    return %arg0, %c0_i32, %c0_i32_0 : i32, i32, i32
  }
}

</mosaic_0001>

<llo_original>
// kernel: conv2d_bn_relu.1
$region0: #{conv2d_bn_relu.1}
  #allocation0 [shape = 'u32[]', space=smem, size = 0x4, offset = 0x4, fixed_abs, tag = 'smem constant byte address 0x4 - core index']
  #allocation1 [shape = 'u32[144,128]{1,0:T(1,128)}', space=vmem, size = 0x12000, scoped, tag = 'internal scratch']
  %s0 = inlined_call_operand.vmem [shape: bf16[9,16,16], index: 0, kind: input, shape index: {}]
  %s1 = inlined_call_operand.vmem [shape: f32[16,1], index: 1, kind: input, shape index: {}]
  %s2 = inlined_call_operand.vmem [shape: bf16[2,16,512], index: 2, kind: input, shape index: {}]
  %s3 = inlined_call_operand.vmem [shape: f32[2,16,384], index: 3, kind: output, shape index: {}]
  %s4 = sld [smem:[#allocation0]]
  $region45: #{conv2d_bn_relu.1} parent=0
    _
  %s6 = ssub.s32 1, %s4
  %s7 = scalar_select 0, %s6, %s4
  loop: start=0, step=1, limit=4
  $region2: #{conv2d_bn_relu.1} parent=0 // loop_pre_header
    _
  $region3: #{conv2d_bn_relu.1} parent=0 // loop_header
    %s9 = sphi 0, %s13
    %p10 = scmp.ge.s32.totalorder %s9, 4
    %s17 = sphi 0, %s17
    %s19 = sphi 0, %s17
    %s20 = sphi 0, %s19
    %s34 = sphi 0, %s20
    %s38 = sphi 0, %s38
    %s40 = sphi 0, %s38
    %s41 = sphi 0, %s40
    %s55 = sphi 0, %s41
    %s61 = sphi 0, %s63
    %s64 = sphi 0, %s61
    %s65 = sphi 0, %s64
    %s81 = sphi 0, %s65
    %s87 = sphi 0, %s89
    %s90 = sphi 0, %s87
    %s91 = sphi 0, %s90
    %s107 = sphi 0, %s91
  $region4: #{conv2d_bn_relu.1} parent=0 // loop_header_branch
    %12 = sbr.rel (%p10) target = $region8
  $region5: #{conv2d_bn_relu.1} parent=0 // loop_body
    %s14 = ssub.s32 %s9, 1
    %s15 = ssub.s32 %s9, 2
    %s16 = sadd.s32 %s9, 1
    %s18 = sadd.s32 %s17, 1
    %p21 = scmp.eq.s32.totalorder %s9, 1
    %p22 = scmp.ne.s32.totalorder %s17, %s19
    %p23 = scmp.eq.s32.totalorder %s9, 0
    %p24 = por %p22, %p23
    %p25 = scmp.ne.s32.totalorder %s17, %s19
    %p26 = scmp.eq.s32.totalorder %s14, 1
    %p27 = por %p25, %p26
    %p28 = scmp.ne.s32.totalorder %s19, %s20
    %p29 = scmp.eq.s32.totalorder %s14, 0
    %p30 = por %p28, %p29
    %p31 = scmp.ne.s32.totalorder %s19, %s20
    %p32 = scmp.eq.s32.totalorder %s15, 1
    %p33 = por %p31, %p32
    %p35 = scmp.ne.s32.totalorder %s20, %s34
    %p36 = scmp.eq.s32.totalorder %s15, 0
    %p37 = por %p35, %p36
    %s39 = sadd.s32 %s38, 1
    %p42 = scmp.eq.s32.totalorder %s9, 1
    %p43 = scmp.ne.s32.totalorder %s38, %s40
    %p44 = scmp.eq.s32.totalorder %s9, 0
    %p45 = por %p43, %p44
    %p46 = scmp.ne.s32.totalorder %s38, %s40
    %p47 = scmp.eq.s32.totalorder %s14, 1
    %p48 = por %p46, %p47
    %p49 = scmp.ne.s32.totalorder %s40, %s41
    %p50 = scmp.eq.s32.totalorder %s14, 0
    %p51 = por %p49, %p50
    %p52 = scmp.ne.s32.totalorder %s40, %s41
    %p53 = scmp.eq.s32.totalorder %s15, 1
    %p54 = por %p52, %p53
    %p56 = scmp.ne.s32.totalorder %s41, %s55
    %p57 = scmp.eq.s32.totalorder %s15, 0
    %p58 = por %p56, %p57
    %s59 = ssub.s32 %s9, %s16
    %p60 = scmp.eq.s32.totalorder %s59, 0
    %s62 = sadd.s32 %s61, 1
    %s63 = scalar_select %p60, %s61, %s62
    %p66 = pneg %p60
    %p67 = scmp.eq.s32.totalorder %s9, 1
    %p68 = por %p66, %p67
    %p69 = scmp.ne.s32.totalorder %s61, %s64
    %p70 = scmp.eq.s32.totalorder %s9, 0
    %p71 = por %p69, %p70
    %p72 = scmp.ne.s32.totalorder %s61, %s64
    %p73 = scmp.eq.s32.totalorder %s14, 1
    %p74 = por %p72, %p73
    %p75 = scmp.ne.s32.totalorder %s64, %s65
    %p76 = scmp.eq.s32.totalorder %s14, 0
    %p77 = por %p75, %p76
    %p78 = scmp.ne.s32.totalorder %s64, %s65
    %p79 = scmp.eq.s32.totalorder %s15, 1
    %p80 = por %p78, %p79
    %p82 = scmp.ne.s32.totalorder %s65, %s81
    %p83 = scmp.eq.s32.totalorder %s15, 0
    %p84 = por %p82, %p83
    %s85 = ssub.s32 %s9, %s16
    %p86 = scmp.eq.s32.totalorder %s85, 0
    %s88 = sadd.s32 %s87, 1
    %s89 = scalar_select %p86, %s87, %s88
    %p92 = pneg %p86
    %p93 = scmp.eq.s32.totalorder %s9, 1
    %p94 = por %p92, %p93
    %p95 = scmp.ne.s32.totalorder %s87, %s90
    %p96 = scmp.eq.s32.totalorder %s9, 0
    %p97 = por %p95, %p96
    %p98 = scmp.ne.s32.totalorder %s87, %s90
    %p99 = scmp.eq.s32.totalorder %s14, 1
    %p100 = por %p98, %p99
    %p101 = scmp.ne.s32.totalorder %s90, %s91
    %p102 = scmp.eq.s32.totalorder %s14, 0
    %p103 = por %p101, %p102
    %p104 = scmp.ne.s32.totalorder %s90, %s91
    %p105 = scmp.eq.s32.totalorder %s15, 1
    %p106 = por %p104, %p105
    %p108 = scmp.ne.s32.totalorder %s91, %s107
    %p109 = scmp.eq.s32.totalorder %s15, 0
    %p110 = por %p108, %p109
    %p111 = scmp.le.s32.totalorder 1, %s9
    %p112 = scmp.lt.s32.totalorder %s9, 3
    %p113 = pnand %p111, %p112
    %p114 = pneg %p113
    // Predicated region
    $region9: #{conv2d_bn_relu.1} parent=5 // pred_check
      _
    $region10: #{conv2d_bn_relu.1} parent=5 // pred_check_branch
      %116 = sbr.rel (%p113) target = $region12
    $region11: #{conv2d_bn_relu.1} parent=5 // pred_region
      %s117 = ssub.s32 %s9, 1
      // Predicated region
      $region13: #{conv2d_bn_relu.1} parent=11 // pred_check
        %p118 = pneg %p30
      $region14: #{conv2d_bn_relu.1} parent=11 // pred_check_branch
        %120 = sbr.rel (%p118) target = $region16
      $region15: #{conv2d_bn_relu.1} parent=11 // pred_region
        _
      $region16: #{conv2d_bn_relu.1} parent=11 // pred_fallthru
        _
      // Predicated region
      $region17: #{conv2d_bn_relu.1} parent=11 // pred_check
        %p121 = pneg %p51
      $region18: #{conv2d_bn_relu.1} parent=11 // pred_check_branch
        %123 = sbr.rel (%p121) target = $region20
      $region19: #{conv2d_bn_relu.1} parent=11 // pred_region
        _
      $region20: #{conv2d_bn_relu.1} parent=11 // pred_fallthru
        _
    $region12: #{conv2d_bn_relu.1} parent=5 // pred_fallthru
      _
    %p124 = scmp.lt.s32.totalorder %s9, 2
    // Predicated region
    $region21: #{conv2d_bn_relu.1} parent=5 // pred_check
      %p125 = pneg %p124
    $region22: #{conv2d_bn_relu.1} parent=5 // pred_check_branch
      %127 = sbr.rel (%p125) target = $region24
    $region23: #{conv2d_bn_relu.1} parent=5 // pred_region
      // Predicated region
      $region25: #{conv2d_bn_relu.1} parent=23 // pred_check
        %p128 = pneg %p71
      $region26: #{conv2d_bn_relu.1} parent=23 // pred_check_branch
        %130 = sbr.rel (%p128) target = $region28
      $region27: #{conv2d_bn_relu.1} parent=23 // pred_region
        %p131 = scmp.lt.s32.totalorder %s9, 1
        %s132 = scalar_select %p131, %s9, 1
        %s133 = smul.addr %s132, 8
        %s134 = smul.addr %s133, 4
        %s135 = scalar_lea.vmem %s2, %s134
      $region28: #{conv2d_bn_relu.1} parent=23 // pred_fallthru
        _
    $region24: #{conv2d_bn_relu.1} parent=5 // pred_fallthru
      _
    %p136 = scmp.le.s32.totalorder 1, %s9
    %p137 = scmp.lt.s32.totalorder %s9, 3
    %p138 = pnand %p136, %p137
    %p139 = pneg %p138
    // Predicated region
    $region29: #{conv2d_bn_relu.1} parent=5 // pred_check
      _
    $region30: #{conv2d_bn_relu.1} parent=5 // pred_check_branch
      %141 = sbr.rel (%p138) target = $region32
    $region31: #{conv2d_bn_relu.1} parent=5 // pred_region
      %s142 = ssub.s32 %s9, 1
      %p143 = pneg %p30
      %p144 = pneg %p27
      %p145 = pneg %p51
      %p146 = pneg %p48
      %p147 = scmp.lt.s32.totalorder %s14, 1
      %s148 = scalar_select %p147, %s14, 1
      %s149 = smul.addr %s148, 8
      %s150 = smul.addr %s149, 4
      %s151 = scalar_lea.vmem %s2, %s150
      %p152 = pneg %p77
      %p153 = pneg %p74
      %p154 = pneg %p103
      %p155 = pneg %p100
      %p156 = scmp.lt.s32.totalorder %s14, 1
      %s157 = scalar_select %p156, %s14, 1
      %s158 = smul.addr %s157, 6
      %s159 = smul.addr %s158, 8
      %s160 = scalar_lea.vmem %s3, %s159
      %p161 = scmp.lt.s32.totalorder %s14, 1
      %s162 = scalar_select %p161, %s14, 1
      %s163 = smul.addr %s162, 8
      %s164 = smul.addr %s163, 4
      %s165 = scalar_lea.vmem %s2, %s164
      %p166 = scmp.lt.s32.totalorder %s14, 1
      %s167 = scalar_select %p166, %s14, 1
      %s168 = smul.addr %s167, 6
      %s169 = smul.addr %s168, 8
      %s170 = scalar_lea.vmem %s3, %s169
      %v172 = vld [vmem:[%s0] sm:$0xf]
      %v173 = vld [vmem:[%s0 + $0x4] sm:$0xf]
      %v174 = vld [vmem:[%s165] sm:$0xff]
      %v175 = vld [vmem:[%s165 + $0x8] sm:$0xf]
      %v176 = vld [vmem:[%s165 + $0x10] sm:$0xff]
      %v177 = vld [vmem:[%s165 + $0x18] sm:$0xf]
      %s178 = scalar_lea.vmem %s0, 8
      %v179 = vld [vmem:[%s178] sm:$0xf]
      %v180 = vld [vmem:[%s178 + $0x4] sm:$0xf]
      %v181 = vld [vmem:[%s165] sm:$0xff]
      %v182 = vld [vmem:[%s165 + $0x8] sm:$0xff]
      %v183 = vld [vmem:[%s165 + $0x10] sm:$0xff]
      %v184 = vld [vmem:[%s165 + $0x18] sm:$0xff]
      %v187 = vunpack.c.l.b16 %v179
      %v188 = vunpack.c.l.b16 %v180
      %v189 = vpack.c.b16 %v188, %v187
      %v194 = vunpack.c.l.b16 %v181
      %v195 = vunpack.c.h.b16 %v181
      %v196 = vunpack.c.l.b16 %v182
      %v197 = vunpack.c.h.b16 %v182
      %v198 = vunpack.c.l.b16 %v183
      %v199 = vunpack.c.h.b16 %v183
      %v200 = vunpack.c.l.b16 %v184
      %v201 = vunpack.c.h.b16 %v184
      %v202 = vpack.c.b16 %v198, %v194
      %v203 = vpack.c.b16 %v199, %v195
      %v204 = vpack.c.b16 %v200, %v196
      %v205 = vpack.c.b16 %v201, %v197
      %206 = vrot.lane.b32.xlu0 %v202, 127
      %v207 = vpop.permute.xlu0 %206
      %208 = vrot.lane.b32.xlu0 %v203, 127
      %v209 = vpop.permute.xlu0 %208
      %210 = vrot.lane.b32.xlu0 %v204, 127
      %v211 = vpop.permute.xlu0 %210
      %212 = vrot.lane.b32.xlu0 %v205, 127
      %v213 = vpop.permute.xlu0 %212
      %vm214 = vcmask 1039360
      %v215 = vsel %vm214, %v207, %v209
      %v216 = vsel %vm214, %v209, %v211
      %v217 = vsel %vm214, %v211, %v213
      %vm221 = vcmask 130048
      %v223 = vsel %vm221, %v189, 0
      %225 = vmatprep.subr.bf16.mxu0 0
      %226 = vmatpush1.bf16.msra.mxu0 0
      %227 = vmatprep.subr.bf16.mxu0 0
      %228 = vmatpush1.bf16.msra.mxu0 0
      %229 = vmatprep.subr.bf16.mxu0 0
      %230 = vmatpush1.bf16.msra.mxu0 0
      %231 = vmatprep.subr.bf16.mxu0 0
      %232 = vmatpush1.bf16.msra.mxu0 0
      %233 = vmatprep.subr.bf16.mxu0 0
      %234 = vmatpush1.bf16.msra.mxu0 0
      %235 = vmatprep.subr.bf16.mxu0 0
      %236 = vmatpush1.bf16.msra.mxu0 0
      %237 = vmatprep.subr.bf16.mxu0 0
      %238 = vmatpush1.bf16.msra.mxu0 0
      %239 = vmatprep.subr.bf16.mxu0 %v216
      %240 = vmatpush1.bf16.msra.mxu0 %v215
      %241 = vmatprep.subr.bf16.mxu0 0
      %242 = vmatpush2.bf16.msra.mxu0 0
      %243 = vmatprep.subr.bf16.mxu0 0
      %244 = vmatpush2.bf16.msra.mxu0 0
      %245 = vmatprep.subr.bf16.mxu0 0
      %246 = vmatpush2.bf16.msra.mxu0 0
      %247 = vmatprep.subr.bf16.mxu0 0
      %248 = vmatpush2.bf16.msra.mxu0 0
      %249 = vmatprep.subr.bf16.mxu0 0
      %250 = vmatpush2.bf16.msra.mxu0 0
      %251 = vmatprep.subr.bf16.mxu0 0
      %252 = vmatpush2.bf16.msra.mxu0 0
      %253 = vmatprep.subr.bf16.mxu0 0
      %254 = vmatpush2.bf16.msra.mxu0 0
      %255 = vmatprep.subr.bf16.mxu0 0
      %256 = vmatpush2.bf16.msra.mxu0 0
      %257 = vmatprep.mubr.bf16.mxu0 0
      %258 = vmatmul.mubr.bf16.gmra.mxu0 %v223
      %v259 = vpop.f32.mrf.mxu0
      %v260 = vadd.f32 0.0, %v259
      %v261 = vpop.f32.mrf.mxu0
      %v262 = vadd.f32 0.0, %v261
      %v263 = vpop.f32.mrf.mxu0
      %v264 = vadd.f32 0.0, %v263
      %v265 = vpop.f32.mrf.mxu0
      %v266 = vadd.f32 0.0, %v265
      %267 = vdwg.mxu0
      %268 = vmatprep.subr.bf16.mxu0 0
      %269 = vmatpush1.bf16.msra.mxu0 0
      %270 = vmatprep.subr.bf16.mxu0 0
      %271 = vmatpush1.bf16.msra.mxu0 0
      %272 = vmatprep.subr.bf16.mxu0 0
      %273 = vmatpush1.bf16.msra.mxu0 0
      %274 = vmatprep.subr.bf16.mxu0 0
      %275 = vmatpush1.bf16.msra.mxu0 0
      %276 = vmatprep.subr.bf16.mxu0 0
      %277 = vmatpush1.bf16.msra.mxu0 0
      %278 = vmatprep.subr.bf16.mxu0 0
      %279 = vmatpush1.bf16.msra.mxu0 0
      %280 = vmatprep.subr.bf16.mxu0 0
      %281 = vmatpush1.bf16.msra.mxu0 0
      %282 = vmatprep.subr.bf16.mxu0 0
      %283 = vmatpush1.bf16.msra.mxu0 %v217
      %284 = vmatprep.subr.bf16.mxu0 0
      %285 = vmatpush2.bf16.msra.mxu0 0
      %286 = vmatprep.subr.bf16.mxu0 0
      %287 = vmatpush2.bf16.msra.mxu0 0
      %288 = vmatprep.subr.bf16.mxu0 0
      %289 = vmatpush2.bf16.msra.mxu0 0
      %290 = vmatprep.subr.bf16.mxu0 0
      %291 = vmatpush2.bf16.msra.mxu0 0
      %292 = vmatprep.subr.bf16.mxu0 0
      %293 = vmatpush2.bf16.msra.mxu0 0
      %294 = vmatprep.subr.bf16.mxu0 0
      %295 = vmatpush2.bf16.msra.mxu0 0
      %296 = vmatprep.subr.bf16.mxu0 0
      %297 = vmatpush2.bf16.msra.mxu0 0
      %298 = vmatprep.subr.bf16.mxu0 0
      %299 = vmatpush2.bf16.msra.mxu0 0
      %300 = vmatprep.mubr.bf16.mxu0 0
      %301 = vmatmul.mubr.bf16.gmra.mxu0 %v223
      %v302 = vpop.f32.mrf.mxu0
      %v303 = vadd.f32 0.0, %v302
      %v304 = vpop.f32.mrf.mxu0
      %v305 = vpop.f32.mrf.mxu0
      %v306 = vadd.f32 0.0, %v305
      %v307 = vpop.f32.mrf.mxu0
      %308 = vdwg.mxu0
      %v311 = vunpack.c.l.b16 %v172
      %v312 = vunpack.c.l.b16 %v173
      %v313 = vpack.c.b16 %v312, %v311
      %v318 = vunpack.c.l.b16 %v174
      %v319 = vunpack.c.h.b16 %v174
      %v320 = vunpack.c.l.b16 %v175
      %v321 = vunpack.c.l.b16 %v176
      %v322 = vunpack.c.h.b16 %v176
      %v323 = vunpack.c.l.b16 %v177
      %v324 = vpack.c.b16 %v321, %v318
      %v325 = vpack.c.b16 %v322, %v319
      %v326 = vpack.c.b16 %v323, %v320
      %v331 = vsel %vm221, %v313, 0
      %333 = vmatprep.subr.bf16.mxu0 0
      %334 = vmatpush1.bf16.msra.mxu0 0
      %335 = vmatprep.subr.bf16.mxu0 0
      %336 = vmatpush1.bf16.msra.mxu0 0
      %337 = vmatprep.subr.bf16.mxu0 0
      %338 = vmatpush1.bf16.msra.mxu0 0
      %339 = vmatprep.subr.bf16.mxu0 0
      %340 = vmatpush1.bf16.msra.mxu0 0
      %341 = vmatprep.subr.bf16.mxu0 0
      %342 = vmatpush1.bf16.msra.mxu0 0
      %343 = vmatprep.subr.bf16.mxu0 0
      %344 = vmatpush1.bf16.msra.mxu0 0
      %345 = vmatprep.subr.bf16.mxu0 0
      %346 = vmatpush1.bf16.msra.mxu0 0
      %347 = vmatprep.subr.bf16.mxu0 %v325
      %348 = vmatpush1.bf16.msra.mxu0 %v324
      %349 = vmatprep.subr.bf16.mxu0 0
      %350 = vmatpush2.bf16.msra.mxu0 0
      %351 = vmatprep.subr.bf16.mxu0 0
      %352 = vmatpush2.bf16.msra.mxu0 0
      %353 = vmatprep.subr.bf16.mxu0 0
      %354 = vmatpush2.bf16.msra.mxu0 0
      %355 = vmatprep.subr.bf16.mxu0 0
      %356 = vmatpush2.bf16.msra.mxu0 0
      %357 = vmatprep.subr.bf16.mxu0 0
      %358 = vmatpush2.bf16.msra.mxu0 0
      %359 = vmatprep.subr.bf16.mxu0 0
      %360 = vmatpush2.bf16.msra.mxu0 0
      %361 = vmatprep.subr.bf16.mxu0 0
      %362 = vmatpush2.bf16.msra.mxu0 0
      %363 = vmatprep.subr.bf16.mxu0 0
      %364 = vmatpush2.bf16.msra.mxu0 0
      %365 = vmatprep.mubr.bf16.mxu0 0
      %366 = vmatmul.mubr.bf16.gmra.mxu0 %v331
      %v367 = vpop.f32.mrf.mxu0
      %v368 = vadd.f32 %v260, %v367
      %v369 = vpop.f32.mrf.mxu0
      %v370 = vadd.f32 %v262, %v369
      %v371 = vpop.f32.mrf.mxu0
      %v372 = vadd.f32 %v264, %v371
      %v373 = vpop.f32.mrf.mxu0
      %v374 = vadd.f32 %v266, %v373
      %375 = vdwg.mxu0
      %376 = vmatprep.subr.bf16.mxu0 0
      %377 = vmatpush1.bf16.msra.mxu0 0
      %378 = vmatprep.subr.bf16.mxu0 0
      %379 = vmatpush1.bf16.msra.mxu0 0
      %380 = vmatprep.subr.bf16.mxu0 0
      %381 = vmatpush1.bf16.msra.mxu0 0
      %382 = vmatprep.subr.bf16.mxu0 0
      %383 = vmatpush1.bf16.msra.mxu0 0
      %384 = vmatprep.subr.bf16.mxu0 0
      %385 = vmatpush1.bf16.msra.mxu0 0
      %386 = vmatprep.subr.bf16.mxu0 0
      %387 = vmatpush1.bf16.msra.mxu0 0
      %388 = vmatprep.subr.bf16.mxu0 0
      %389 = vmatpush1.bf16.msra.mxu0 0
      %390 = vmatprep.subr.bf16.mxu0 0
      %391 = vmatpush1.bf16.msra.mxu0 %v326
      %392 = vmatprep.subr.bf16.mxu0 0
      %393 = vmatpush2.bf16.msra.mxu0 0
      %394 = vmatprep.subr.bf16.mxu0 0
      %395 = vmatpush2.bf16.msra.mxu0 0
      %396 = vmatprep.subr.bf16.mxu0 0
      %397 = vmatpush2.bf16.msra.mxu0 0
      %398 = vmatprep.subr.bf16.mxu0 0
      %399 = vmatpush2.bf16.msra.mxu0 0
      %400 = vmatprep.subr.bf16.mxu0 0
      %401 = vmatpush2.bf16.msra.mxu0 0
      %402 = vmatprep.subr.bf16.mxu0 0
      %403 = vmatpush2.bf16.msra.mxu0 0
      %404 = vmatprep.subr.bf16.mxu0 0
      %405 = vmatpush2.bf16.msra.mxu0 0
      %406 = vmatprep.subr.bf16.mxu0 0
      %407 = vmatpush2.bf16.msra.mxu0 0
      %408 = vmatprep.mubr.bf16.mxu0 0
      %409 = vmatmul.mubr.bf16.gmra.mxu0 %v331
      %v410 = vpop.f32.mrf.mxu0
      %v411 = vadd.f32 %v303, %v410
      %v412 = vpop.f32.mrf.mxu0
      %v413 = vpop.f32.mrf.mxu0
      %v414 = vadd.f32 %v306, %v413
      %v415 = vpop.f32.mrf.mxu0
      %416 = vdwg.mxu0
      %s417 = scalar_lea.vmem %s0, 16
      %v418 = vld [vmem:[%s417] sm:$0xf]
      %v419 = vld [vmem:[%s417 + $0x4] sm:$0xf]
      %v422 = vunpack.c.l.b16 %v418
      %v423 = vunpack.c.l.b16 %v419
      %v424 = vpack.c.b16 %v423, %v422
      %425 = vrot.lane.b32.xlu0 %v202, 126
      %v426 = vpop.permute.xlu0 %425
      %427 = vrot.lane.b32.xlu0 %v203, 126
      %v428 = vpop.permute.xlu0 %427
      %429 = vrot.lane.b32.xlu0 %v204, 126
      %v430 = vpop.permute.xlu0 %429
      %431 = vrot.lane.b32.xlu0 %v205, 126
      %v432 = vpop.permute.xlu0 %431
      %vm433 = vcmask 1031168
      %v434 = vsel %vm433, %v426, %v428
      %v435 = vsel %vm433, %v428, %v430
      %v436 = vsel %vm433, %v430, %v432
      %v441 = vsel %vm221, %v424, 0
      %443 = vmatprep.subr.bf16.mxu0 0
      %444 = vmatpush1.bf16.msra.mxu0 0
      %445 = vmatprep.subr.bf16.mxu0 0
      %446 = vmatpush1.bf16.msra.mxu0 0
      %447 = vmatprep.subr.bf16.mxu0 0
      %448 = vmatpush1.bf16.msra.mxu0 0
      %449 = vmatprep.subr.bf16.mxu0 0
      %450 = vmatpush1.bf16.msra.mxu0 0
      %451 = vmatprep.subr.bf16.mxu0 0
      %452 = vmatpush1.bf16.msra.mxu0 0
      %453 = vmatprep.subr.bf16.mxu0 0
      %454 = vmatpush1.bf16.msra.mxu0 0
      %455 = vmatprep.subr.bf16.mxu0 0
      %456 = vmatpush1.bf16.msra.mxu0 0
      %457 = vmatprep.subr.bf16.mxu0 %v435
      %458 = vmatpush1.bf16.msra.mxu0 %v434
      %459 = vmatprep.subr.bf16.mxu0 0
      %460 = vmatpush2.bf16.msra.mxu0 0
      %461 = vmatprep.subr.bf16.mxu0 0
      %462 = vmatpush2.bf16.msra.mxu0 0
      %463 = vmatprep.subr.bf16.mxu0 0
      %464 = vmatpush2.bf16.msra.mxu0 0
      %465 = vmatprep.subr.bf16.mxu0 0
      %466 = vmatpush2.bf16.msra.mxu0 0
      %467 = vmatprep.subr.bf16.mxu0 0
      %468 = vmatpush2.bf16.msra.mxu0 0
      %469 = vmatprep.subr.bf16.mxu0 0
      %470 = vmatpush2.bf16.msra.mxu0 0
      %471 = vmatprep.subr.bf16.mxu0 0
      %472 = vmatpush2.bf16.msra.mxu0 0
      %473 = vmatprep.subr.bf16.mxu0 0
      %474 = vmatpush2.bf16.msra.mxu0 0
      %475 = vmatprep.mubr.bf16.mxu0 0
      %476 = vmatmul.mubr.bf16.gmra.mxu0 %v441
      %v477 = vpop.f32.mrf.mxu0
      %v478 = vadd.f32 0.0, %v477
      %v479 = vpop.f32.mrf.mxu0
      %v480 = vadd.f32 0.0, %v479
      %v481 = vpop.f32.mrf.mxu0
      %v482 = vadd.f32 0.0, %v481
      %v483 = vpop.f32.mrf.mxu0
      %v484 = vadd.f32 0.0, %v483
      %485 = vdwg.mxu0
      %486 = vmatprep.subr.bf16.mxu0 0
      %487 = vmatpush1.bf16.msra.mxu0 0
      %488 = vmatprep.subr.bf16.mxu0 0
      %489 = vmatpush1.bf16.msra.mxu0 0
      %490 = vmatprep.subr.bf16.mxu0 0
      %491 = vmatpush1.bf16.msra.mxu0 0
      %492 = vmatprep.subr.bf16.mxu0 0
      %493 = vmatpush1.bf16.msra.mxu0 0
      %494 = vmatprep.subr.bf16.mxu0 0
      %495 = vmatpush1.bf16.msra.mxu0 0
      %496 = vmatprep.subr.bf16.mxu0 0
      %497 = vmatpush1.bf16.msra.mxu0 0
      %498 = vmatprep.subr.bf16.mxu0 0
      %499 = vmatpush1.bf16.msra.mxu0 0
      %500 = vmatprep.subr.bf16.mxu0 0
      %501 = vmatpush1.bf16.msra.mxu0 %v436
      %502 = vmatprep.subr.bf16.mxu0 0
      %503 = vmatpush2.bf16.msra.mxu0 0
      %504 = vmatprep.subr.bf16.mxu0 0
      %505 = vmatpush2.bf16.msra.mxu0 0
      %506 = vmatprep.subr.bf16.mxu0 0
      %507 = vmatpush2.bf16.msra.mxu0 0
      %508 = vmatprep.subr.bf16.mxu0 0
      %509 = vmatpush2.bf16.msra.mxu0 0
      %510 = vmatprep.subr.bf16.mxu0 0
      %511 = vmatpush2.bf16.msra.mxu0 0
      %512 = vmatprep.subr.bf16.mxu0 0
      %513 = vmatpush2.bf16.msra.mxu0 0
      %514 = vmatprep.subr.bf16.mxu0 0
      %515 = vmatpush2.bf16.msra.mxu0 0
      %516 = vmatprep.subr.bf16.mxu0 0
      %517 = vmatpush2.bf16.msra.mxu0 0
      %518 = vmatprep.mubr.bf16.mxu0 0
      %519 = vmatmul.mubr.bf16.gmra.mxu0 %v441
      %v520 = vpop.f32.mrf.mxu0
      %v521 = vadd.f32 0.0, %v520
      %v522 = vpop.f32.mrf.mxu0
      %v523 = vpop.f32.mrf.mxu0
      %v524 = vadd.f32 0.0, %v523
      %v525 = vpop.f32.mrf.mxu0
      %526 = vdwg.mxu0
      %v527 = vadd.f32 %v368, %v478
      %v528 = vadd.f32 %v370, %v480
      %v529 = vadd.f32 %v411, %v521
      %v530 = vadd.f32 %v372, %v482
      %v531 = vadd.f32 %v374, %v484
      %v532 = vadd.f32 %v414, %v524
      %s533 = scalar_lea.vmem %s0, 24
      %v534 = vld [vmem:[%s533] sm:$0xf]
      %v535 = vld [vmem:[%s533 + $0x4] sm:$0xf]
      %v538 = vunpack.c.l.b16 %v534
      %v539 = vunpack.c.l.b16 %v535
      %v540 = vpack.c.b16 %v539, %v538
      %541 = vrot.lane.b32.xlu0 %v202, 110
      %v542 = vpop.permute.xlu0 %541
      %543 = vrot.lane.b32.xlu0 %v203, 110
      %v544 = vpop.permute.xlu0 %543
      %545 = vrot.lane.b32.xlu0 %v204, 110
      %v546 = vpop.permute.xlu0 %545
      %547 = vrot.lane.b32.xlu0 %v205, 110
      %v548 = vpop.permute.xlu0 %547
      %vm549 = vcmask 900096
      %v550 = vsel %vm549, %v542, %v544
      %v551 = vsel %vm549, %v544, %v546
      %v552 = vsel %vm549, %v546, %v548
      %v557 = vsel %vm221, %v540, 0
      %559 = vmatprep.subr.bf16.mxu0 0
      %560 = vmatpush1.bf16.msra.mxu0 0
      %561 = vmatprep.subr.bf16.mxu0 0
      %562 = vmatpush1.bf16.msra.mxu0 0
      %563 = vmatprep.subr.bf16.mxu0 0
      %564 = vmatpush1.bf16.msra.mxu0 0
      %565 = vmatprep.subr.bf16.mxu0 0
      %566 = vmatpush1.bf16.msra.mxu0 0
      %567 = vmatprep.subr.bf16.mxu0 0
      %568 = vmatpush1.bf16.msra.mxu0 0
      %569 = vmatprep.subr.bf16.mxu0 0
      %570 = vmatpush1.bf16.msra.mxu0 0
      %571 = vmatprep.subr.bf16.mxu0 0
      %572 = vmatpush1.bf16.msra.mxu0 0
      %573 = vmatprep.subr.bf16.mxu0 %v551
      %574 = vmatpush1.bf16.msra.mxu0 %v550
      %575 = vmatprep.subr.bf16.mxu0 0
      %576 = vmatpush2.bf16.msra.mxu0 0
      %577 = vmatprep.subr.bf16.mxu0 0
      %578 = vmatpush2.bf16.msra.mxu0 0
      %579 = vmatprep.subr.bf16.mxu0 0
      %580 = vmatpush2.bf16.msra.mxu0 0
      %581 = vmatprep.subr.bf16.mxu0 0
      %582 = vmatpush2.bf16.msra.mxu0 0
      %583 = vmatprep.subr.bf16.mxu0 0
      %584 = vmatpush2.bf16.msra.mxu0 0
      %585 = vmatprep.subr.bf16.mxu0 0
      %586 = vmatpush2.bf16.msra.mxu0 0
      %587 = vmatprep.subr.bf16.mxu0 0
      %588 = vmatpush2.bf16.msra.mxu0 0
      %589 = vmatprep.subr.bf16.mxu0 0
      %590 = vmatpush2.bf16.msra.mxu0 0
      %591 = vmatprep.mubr.bf16.mxu0 0
      %592 = vmatmul.mubr.bf16.gmra.mxu0 %v557
      %v593 = vpop.f32.mrf.mxu0
      %v594 = vadd.f32 0.0, %v593
      %v595 = vpop.f32.mrf.mxu0
      %v596 = vadd.f32 0.0, %v595
      %v597 = vpop.f32.mrf.mxu0
      %v598 = vadd.f32 0.0, %v597
      %v599 = vpop.f32.mrf.mxu0
      %v600 = vadd.f32 0.0, %v599
      %601 = vdwg.mxu0
      %602 = vmatprep.subr.bf16.mxu0 0
      %603 = vmatpush1.bf16.msra.mxu0 0
      %604 = vmatprep.subr.bf16.mxu0 0
      %605 = vmatpush1.bf16.msra.mxu0 0
      %606 = vmatprep.subr.bf16.mxu0 0
      %607 = vmatpush1.bf16.msra.mxu0 0
      %608 = vmatprep.subr.bf16.mxu0 0
      %609 = vmatpush1.bf16.msra.mxu0 0
      %610 = vmatprep.subr.bf16.mxu0 0
      %611 = vmatpush1.bf16.msra.mxu0 0
      %612 = vmatprep.subr.bf16.mxu0 0
      %613 = vmatpush1.bf16.msra.mxu0 0
      %614 = vmatprep.subr.bf16.mxu0 0
      %615 = vmatpush1.bf16.msra.mxu0 0
      %616 = vmatprep.subr.bf16.mxu0 0
      %617 = vmatpush1.bf16.msra.mxu0 %v552
      %618 = vmatprep.subr.bf16.mxu0 0
      %619 = vmatpush2.bf16.msra.mxu0 0
      %620 = vmatprep.subr.bf16.mxu0 0
      %621 = vmatpush2.bf16.msra.mxu0 0
      %622 = vmatprep.subr.bf16.mxu0 0
      %623 = vmatpush2.bf16.msra.mxu0 0
      %624 = vmatprep.subr.bf16.mxu0 0
      %625 = vmatpush2.bf16.msra.mxu0 0
      %626 = vmatprep.subr.bf16.mxu0 0
      %627 = vmatpush2.bf16.msra.mxu0 0
      %628 = vmatprep.subr.bf16.mxu0 0
      %629 = vmatpush2.bf16.msra.mxu0 0
      %630 = vmatprep.subr.bf16.mxu0 0
      %631 = vmatpush2.bf16.msra.mxu0 0
      %632 = vmatprep.subr.bf16.mxu0 0
      %633 = vmatpush2.bf16.msra.mxu0 0
      %634 = vmatprep.mubr.bf16.mxu0 0
      %635 = vmatmul.mubr.bf16.gmra.mxu0 %v557
      %v636 = vpop.f32.mrf.mxu0
      %v637 = vadd.f32 0.0, %v636
      %v638 = vpop.f32.mrf.mxu0
      %v639 = vpop.f32.mrf.mxu0
      %v640 = vadd.f32 0.0, %v639
      %v641 = vpop.f32.mrf.mxu0
      %642 = vdwg.mxu0
      %v643 = vadd.f32 %v527, %v594
      %v644 = vadd.f32 %v528, %v596
      %v645 = vadd.f32 %v529, %v637
      %v646 = vadd.f32 %v530, %v598
      %v647 = vadd.f32 %v531, %v600
      %v648 = vadd.f32 %v532, %v640
      %s649 = scalar_lea.vmem %s0, 32
      %v650 = vld [vmem:[%s649] sm:$0xf]
      %v651 = vld [vmem:[%s649 + $0x4] sm:$0xf]
      %v654 = vunpack.c.l.b16 %v650
      %v655 = vunpack.c.l.b16 %v651
      %v656 = vpack.c.b16 %v655, %v654
      %657 = vrot.lane.b32.xlu0 %v202, 109
      %v658 = vpop.permute.xlu0 %657
      %659 = vrot.lane.b32.xlu0 %v203, 109
      %v660 = vpop.permute.xlu0 %659
      %661 = vrot.lane.b32.xlu0 %v204, 109
      %v662 = vpop.permute.xlu0 %661
      %663 = vrot.lane.b32.xlu0 %v205, 109
      %v664 = vpop.permute.xlu0 %663
      %vm665 = vcmask 891904
      %v666 = vsel %vm665, %v658, %v660
      %v667 = vsel %vm665, %v660, %v662
      %v668 = vsel %vm665, %v662, %v664
      %v673 = vsel %vm221, %v656, 0
      %675 = vmatprep.subr.bf16.mxu0 0
      %676 = vmatpush1.bf16.msra.mxu0 0
      %677 = vmatprep.subr.bf16.mxu0 0
      %678 = vmatpush1.bf16.msra.mxu0 0
      %679 = vmatprep.subr.bf16.mxu0 0
      %680 = vmatpush1.bf16.msra.mxu0 0
      %681 = vmatprep.subr.bf16.mxu0 0
      %682 = vmatpush1.bf16.msra.mxu0 0
      %683 = vmatprep.subr.bf16.mxu0 0
      %684 = vmatpush1.bf16.msra.mxu0 0
      %685 = vmatprep.subr.bf16.mxu0 0
      %686 = vmatpush1.bf16.msra.mxu0 0
      %687 = vmatprep.subr.bf16.mxu0 0
      %688 = vmatpush1.bf16.msra.mxu0 0
      %689 = vmatprep.subr.bf16.mxu0 %v667
      %690 = vmatpush1.bf16.msra.mxu0 %v666
      %691 = vmatprep.subr.bf16.mxu0 0
      %692 = vmatpush2.bf16.msra.mxu0 0
      %693 = vmatprep.subr.bf16.mxu0 0
      %694 = vmatpush2.bf16.msra.mxu0 0
      %695 = vmatprep.subr.bf16.mxu0 0
      %696 = vmatpush2.bf16.msra.mxu0 0
      %697 = vmatprep.subr.bf16.mxu0 0
      %698 = vmatpush2.bf16.msra.mxu0 0
      %699 = vmatprep.subr.bf16.mxu0 0
      %700 = vmatpush2.bf16.msra.mxu0 0
      %701 = vmatprep.subr.bf16.mxu0 0
      %702 = vmatpush2.bf16.msra.mxu0 0
      %703 = vmatprep.subr.bf16.mxu0 0
      %704 = vmatpush2.bf16.msra.mxu0 0
      %705 = vmatprep.subr.bf16.mxu0 0
      %706 = vmatpush2.bf16.msra.mxu0 0
      %707 = vmatprep.mubr.bf16.mxu0 0
      %708 = vmatmul.mubr.bf16.gmra.mxu0 %v673
      %v709 = vpop.f32.mrf.mxu0
      %v710 = vadd.f32 0.0, %v709
      %v711 = vpop.f32.mrf.mxu0
      %v712 = vadd.f32 0.0, %v711
      %v713 = vpop.f32.mrf.mxu0
      %v714 = vadd.f32 0.0, %v713
      %v715 = vpop.f32.mrf.mxu0
      %v716 = vadd.f32 0.0, %v715
      %717 = vdwg.mxu0
      %718 = vmatprep.subr.bf16.mxu0 0
      %719 = vmatpush1.bf16.msra.mxu0 0
      %720 = vmatprep.subr.bf16.mxu0 0
      %721 = vmatpush1.bf16.msra.mxu0 0
      %722 = vmatprep.subr.bf16.mxu0 0
      %723 = vmatpush1.bf16.msra.mxu0 0
      %724 = vmatprep.subr.bf16.mxu0 0
      %725 = vmatpush1.bf16.msra.mxu0 0
      %726 = vmatprep.subr.bf16.mxu0 0
      %727 = vmatpush1.bf16.msra.mxu0 0
      %728 = vmatprep.subr.bf16.mxu0 0
      %729 = vmatpush1.bf16.msra.mxu0 0
      %730 = vmatprep.subr.bf16.mxu0 0
      %731 = vmatpush1.bf16.msra.mxu0 0
      %732 = vmatprep.subr.bf16.mxu0 0
      %733 = vmatpush1.bf16.msra.mxu0 %v668
      %734 = vmatprep.subr.bf16.mxu0 0
      %735 = vmatpush2.bf16.msra.mxu0 0
      %736 = vmatprep.subr.bf16.mxu0 0
      %737 = vmatpush2.bf16.msra.mxu0 0
      %738 = vmatprep.subr.bf16.mxu0 0
      %739 = vmatpush2.bf16.msra.mxu0 0
      %740 = vmatprep.subr.bf16.mxu0 0
      %741 = vmatpush2.bf16.msra.mxu0 0
      %742 = vmatprep.subr.bf16.mxu0 0
      %743 = vmatpush2.bf16.msra.mxu0 0
      %744 = vmatprep.subr.bf16.mxu0 0
      %745 = vmatpush2.bf16.msra.mxu0 0
      %746 = vmatprep.subr.bf16.mxu0 0
      %747 = vmatpush2.bf16.msra.mxu0 0
      %748 = vmatprep.subr.bf16.mxu0 0
      %749 = vmatpush2.bf16.msra.mxu0 0
      %750 = vmatprep.mubr.bf16.mxu0 0
      %751 = vmatmul.mubr.bf16.gmra.mxu0 %v673
      %v752 = vpop.f32.mrf.mxu0
      %v753 = vadd.f32 0.0, %v752
      %v754 = vpop.f32.mrf.mxu0
      %v755 = vpop.f32.mrf.mxu0
      %v756 = vadd.f32 0.0, %v755
      %v757 = vpop.f32.mrf.mxu0
      %758 = vdwg.mxu0
      %v759 = vadd.f32 %v643, %v710
      %v760 = vadd.f32 %v644, %v712
      %v761 = vadd.f32 %v645, %v753
      %v762 = vadd.f32 %v646, %v714
      %v763 = vadd.f32 %v647, %v716
      %v764 = vadd.f32 %v648, %v756
      %s765 = scalar_lea.vmem %s0, 40
      %v766 = vld [vmem:[%s765] sm:$0xf]
      %v767 = vld [vmem:[%s765 + $0x4] sm:$0xf]
      %v770 = vunpack.c.l.b16 %v766
      %v771 = vunpack.c.l.b16 %v767
      %v772 = vpack.c.b16 %v771, %v770
      %773 = vrot.lane.b32.xlu0 %v202, 108
      %v774 = vpop.permute.xlu0 %773
      %775 = vrot.lane.b32.xlu0 %v203, 108
      %v776 = vpop.permute.xlu0 %775
      %777 = vrot.lane.b32.xlu0 %v204, 108
      %v778 = vpop.permute.xlu0 %777
      %779 = vrot.lane.b32.xlu0 %v205, 108
      %v780 = vpop.permute.xlu0 %779
      %vm781 = vcmask 883712
      %v782 = vsel %vm781, %v774, %v776
      %v783 = vsel %vm781, %v776, %v778
      %v784 = vsel %vm781, %v778, %v780
      %v789 = vsel %vm221, %v772, 0
      %791 = vmatprep.subr.bf16.mxu0 0
      %792 = vmatpush1.bf16.msra.mxu0 0
      %793 = vmatprep.subr.bf16.mxu0 0
      %794 = vmatpush1.bf16.msra.mxu0 0
      %795 = vmatprep.subr.bf16.mxu0 0
      %796 = vmatpush1.bf16.msra.mxu0 0
      %797 = vmatprep.subr.bf16.mxu0 0
      %798 = vmatpush1.bf16.msra.mxu0 0
      %799 = vmatprep.subr.bf16.mxu0 0
      %800 = vmatpush1.bf16.msra.mxu0 0
      %801 = vmatprep.subr.bf16.mxu0 0
      %802 = vmatpush1.bf16.msra.mxu0 0
      %803 = vmatprep.subr.bf16.mxu0 0
      %804 = vmatpush1.bf16.msra.mxu0 0
      %805 = vmatprep.subr.bf16.mxu0 %v783
      %806 = vmatpush1.bf16.msra.mxu0 %v782
      %807 = vmatprep.subr.bf16.mxu0 0
      %808 = vmatpush2.bf16.msra.mxu0 0
      %809 = vmatprep.subr.bf16.mxu0 0
      %810 = vmatpush2.bf16.msra.mxu0 0
      %811 = vmatprep.subr.bf16.mxu0 0
      %812 = vmatpush2.bf16.msra.mxu0 0
      %813 = vmatprep.subr.bf16.mxu0 0
      %814 = vmatpush2.bf16.msra.mxu0 0
      %815 = vmatprep.subr.bf16.mxu0 0
      %816 = vmatpush2.bf16.msra.mxu0 0
      %817 = vmatprep.subr.bf16.mxu0 0
      %818 = vmatpush2.bf16.msra.mxu0 0
      %819 = vmatprep.subr.bf16.mxu0 0
      %820 = vmatpush2.bf16.msra.mxu0 0
      %821 = vmatprep.subr.bf16.mxu0 0
      %822 = vmatpush2.bf16.msra.mxu0 0
      %823 = vmatprep.mubr.bf16.mxu0 0
      %824 = vmatmul.mubr.bf16.gmra.mxu0 %v789
      %v825 = vpop.f32.mrf.mxu0
      %v826 = vadd.f32 0.0, %v825
      %v827 = vpop.f32.mrf.mxu0
      %v828 = vadd.f32 0.0, %v827
      %v829 = vpop.f32.mrf.mxu0
      %v830 = vadd.f32 0.0, %v829
      %v831 = vpop.f32.mrf.mxu0
      %v832 = vadd.f32 0.0, %v831
      %833 = vdwg.mxu0
      %834 = vmatprep.subr.bf16.mxu0 0
      %835 = vmatpush1.bf16.msra.mxu0 0
      %836 = vmatprep.subr.bf16.mxu0 0
      %837 = vmatpush1.bf16.msra.mxu0 0
      %838 = vmatprep.subr.bf16.mxu0 0
      %839 = vmatpush1.bf16.msra.mxu0 0
      %840 = vmatprep.subr.bf16.mxu0 0
      %841 = vmatpush1.bf16.msra.mxu0 0
      %842 = vmatprep.subr.bf16.mxu0 0
      %843 = vmatpush1.bf16.msra.mxu0 0
      %844 = vmatprep.subr.bf16.mxu0 0
      %845 = vmatpush1.bf16.msra.mxu0 0
      %846 = vmatprep.subr.bf16.mxu0 0
      %847 = vmatpush1.bf16.msra.mxu0 0
      %848 = vmatprep.subr.bf16.mxu0 0
      %849 = vmatpush1.bf16.msra.mxu0 %v784
      %850 = vmatprep.subr.bf16.mxu0 0
      %851 = vmatpush2.bf16.msra.mxu0 0
      %852 = vmatprep.subr.bf16.mxu0 0
      %853 = vmatpush2.bf16.msra.mxu0 0
      %854 = vmatprep.subr.bf16.mxu0 0
      %855 = vmatpush2.bf16.msra.mxu0 0
      %856 = vmatprep.subr.bf16.mxu0 0
      %857 = vmatpush2.bf16.msra.mxu0 0
      %858 = vmatprep.subr.bf16.mxu0 0
      %859 = vmatpush2.bf16.msra.mxu0 0
      %860 = vmatprep.subr.bf16.mxu0 0
      %861 = vmatpush2.bf16.msra.mxu0 0
      %862 = vmatprep.subr.bf16.mxu0 0
      %863 = vmatpush2.bf16.msra.mxu0 0
      %864 = vmatprep.subr.bf16.mxu0 0
      %865 = vmatpush2.bf16.msra.mxu0 0
      %866 = vmatprep.mubr.bf16.mxu0 0
      %867 = vmatmul.mubr.bf16.gmra.mxu0 %v789
      %v868 = vpop.f32.mrf.mxu0
      %v869 = vadd.f32 0.0, %v868
      %v870 = vpop.f32.mrf.mxu0
      %v871 = vpop.f32.mrf.mxu0
      %v872 = vadd.f32 0.0, %v871
      %v873 = vpop.f32.mrf.mxu0
      %874 = vdwg.mxu0
      %v875 = vadd.f32 %v759, %v826
      %v876 = vadd.f32 %v760, %v828
      %v877 = vadd.f32 %v761, %v869
      %v878 = vadd.f32 %v762, %v830
      %v879 = vadd.f32 %v763, %v832
      %v880 = vadd.f32 %v764, %v872
      %s881 = scalar_lea.vmem %s0, 48
      %v882 = vld [vmem:[%s881] sm:$0xf]
      %v883 = vld [vmem:[%s881 + $0x4] sm:$0xf]
      %v886 = vunpack.c.l.b16 %v882
      %v887 = vunpack.c.l.b16 %v883
      %v888 = vpack.c.b16 %v887, %v886
      %889 = vrot.lane.b32.xlu0 %v202, 92
      %v890 = vpop.permute.xlu0 %889
      %891 = vrot.lane.b32.xlu0 %v203, 92
      %v892 = vpop.permute.xlu0 %891
      %893 = vrot.lane.b32.xlu0 %v204, 92
      %v894 = vpop.permute.xlu0 %893
      %895 = vrot.lane.b32.xlu0 %v205, 92
      %v896 = vpop.permute.xlu0 %895
      %vm897 = vcmask 752640
      %v898 = vsel %vm897, %v890, %v892
      %v899 = vsel %vm897, %v892, %v894
      %v900 = vsel %vm897, %v894, %v896
      %v905 = vsel %vm221, %v888, 0
      %907 = vmatprep.subr.bf16.mxu0 0
      %908 = vmatpush1.bf16.msra.mxu0 0
      %909 = vmatprep.subr.bf16.mxu0 0
      %910 = vmatpush1.bf16.msra.mxu0 0
      %911 = vmatprep.subr.bf16.mxu0 0
      %912 = vmatpush1.bf16.msra.mxu0 0
      %913 = vmatprep.subr.bf16.mxu0 0
      %914 = vmatpush1.bf16.msra.mxu0 0
      %915 = vmatprep.subr.bf16.mxu0 0
      %916 = vmatpush1.bf16.msra.mxu0 0
      %917 = vmatprep.subr.bf16.mxu0 0
      %918 = vmatpush1.bf16.msra.mxu0 0
      %919 = vmatprep.subr.bf16.mxu0 0
      %920 = vmatpush1.bf16.msra.mxu0 0
      %921 = vmatprep.subr.bf16.mxu0 %v899
      %922 = vmatpush1.bf16.msra.mxu0 %v898
      %923 = vmatprep.subr.bf16.mxu0 0
      %924 = vmatpush2.bf16.msra.mxu0 0
      %925 = vmatprep.subr.bf16.mxu0 0
      %926 = vmatpush2.bf16.msra.mxu0 0
      %927 = vmatprep.subr.bf16.mxu0 0
      %928 = vmatpush2.bf16.msra.mxu0 0
      %929 = vmatprep.subr.bf16.mxu0 0
      %930 = vmatpush2.bf16.msra.mxu0 0
      %931 = vmatprep.subr.bf16.mxu0 0
      %932 = vmatpush2.bf16.msra.mxu0 0
      %933 = vmatprep.subr.bf16.mxu0 0
      %934 = vmatpush2.bf16.msra.mxu0 0
      %935 = vmatprep.subr.bf16.mxu0 0
      %936 = vmatpush2.bf16.msra.mxu0 0
      %937 = vmatprep.subr.bf16.mxu0 0
      %938 = vmatpush2.bf16.msra.mxu0 0
      %939 = vmatprep.mubr.bf16.mxu0 0
      %940 = vmatmul.mubr.bf16.gmra.mxu0 %v905
      %v941 = vpop.f32.mrf.mxu0
      %v942 = vadd.f32 0.0, %v941
      %v943 = vpop.f32.mrf.mxu0
      %v944 = vadd.f32 0.0, %v943
      %v945 = vpop.f32.mrf.mxu0
      %v946 = vadd.f32 0.0, %v945
      %v947 = vpop.f32.mrf.mxu0
      %v948 = vadd.f32 0.0, %v947
      %949 = vdwg.mxu0
      %950 = vmatprep.subr.bf16.mxu0 0
      %951 = vmatpush1.bf16.msra.mxu0 0
      %952 = vmatprep.subr.bf16.mxu0 0
      %953 = vmatpush1.bf16.msra.mxu0 0
      %954 = vmatprep.subr.bf16.mxu0 0
      %955 = vmatpush1.bf16.msra.mxu0 0
      %956 = vmatprep.subr.bf16.mxu0 0
      %957 = vmatpush1.bf16.msra.mxu0 0
      %958 = vmatprep.subr.bf16.mxu0 0
      %959 = vmatpush1.bf16.msra.mxu0 0
      %960 = vmatprep.subr.bf16.mxu0 0
      %961 = vmatpush1.bf16.msra.mxu0 0
      %962 = vmatprep.subr.bf16.mxu0 0
      %963 = vmatpush1.bf16.msra.mxu0 0
      %964 = vmatprep.subr.bf16.mxu0 0
      %965 = vmatpush1.bf16.msra.mxu0 %v900
      %966 = vmatprep.subr.bf16.mxu0 0
      %967 = vmatpush2.bf16.msra.mxu0 0
      %968 = vmatprep.subr.bf16.mxu0 0
      %969 = vmatpush2.bf16.msra.mxu0 0
      %970 = vmatprep.subr.bf16.mxu0 0
      %971 = vmatpush2.bf16.msra.mxu0 0
      %972 = vmatprep.subr.bf16.mxu0 0
      %973 = vmatpush2.bf16.msra.mxu0 0
      %974 = vmatprep.subr.bf16.mxu0 0
      %975 = vmatpush2.bf16.msra.mxu0 0
      %976 = vmatprep.subr.bf16.mxu0 0
      %977 = vmatpush2.bf16.msra.mxu0 0
      %978 = vmatprep.subr.bf16.mxu0 0
      %979 = vmatpush2.bf16.msra.mxu0 0
      %980 = vmatprep.subr.bf16.mxu0 0
      %981 = vmatpush2.bf16.msra.mxu0 0
      %982 = vmatprep.mubr.bf16.mxu0 0
      %983 = vmatmul.mubr.bf16.gmra.mxu0 %v905
      %v984 = vpop.f32.mrf.mxu0
      %v985 = vadd.f32 0.0, %v984
      %v986 = vpop.f32.mrf.mxu0
      %v987 = vpop.f32.mrf.mxu0
      %v988 = vadd.f32 0.0, %v987
      %v989 = vpop.f32.mrf.mxu0
      %990 = vdwg.mxu0
      %v991 = vadd.f32 %v875, %v942
      %v992 = vadd.f32 %v876, %v944
      %v993 = vadd.f32 %v877, %v985
      %v994 = vadd.f32 %v878, %v946
      %v995 = vadd.f32 %v879, %v948
      %v996 = vadd.f32 %v880, %v988
      %s997 = scalar_lea.vmem %s0, 56
      %v998 = vld [vmem:[%s997] sm:$0xf]
      %v999 = vld [vmem:[%s997 + $0x4] sm:$0xf]
      %v1002 = vunpack.c.l.b16 %v998
      %v1003 = vunpack.c.l.b16 %v999
      %v1004 = vpack.c.b16 %v1003, %v1002
      %1005 = vrot.lane.b32.xlu0 %v202, 91
      %v1006 = vpop.permute.xlu0 %1005
      %1007 = vrot.lane.b32.xlu0 %v203, 91
      %v1008 = vpop.permute.xlu0 %1007
      %1009 = vrot.lane.b32.xlu0 %v204, 91
      %v1010 = vpop.permute.xlu0 %1009
      %1011 = vrot.lane.b32.xlu0 %v205, 91
      %v1012 = vpop.permute.xlu0 %1011
      %vm1013 = vcmask 744448
      %v1014 = vsel %vm1013, %v1006, %v1008
      %v1015 = vsel %vm1013, %v1008, %v1010
      %v1016 = vsel %vm1013, %v1010, %v1012
      %v1021 = vsel %vm221, %v1004, 0
      %1023 = vmatprep.subr.bf16.mxu0 0
      %1024 = vmatpush1.bf16.msra.mxu0 0
      %1025 = vmatprep.subr.bf16.mxu0 0
      %1026 = vmatpush1.bf16.msra.mxu0 0
      %1027 = vmatprep.subr.bf16.mxu0 0
      %1028 = vmatpush1.bf16.msra.mxu0 0
      %1029 = vmatprep.subr.bf16.mxu0 0
      %1030 = vmatpush1.bf16.msra.mxu0 0
      %1031 = vmatprep.subr.bf16.mxu0 0
      %1032 = vmatpush1.bf16.msra.mxu0 0
      %1033 = vmatprep.subr.bf16.mxu0 0
      %1034 = vmatpush1.bf16.msra.mxu0 0
      %1035 = vmatprep.subr.bf16.mxu0 0
      %1036 = vmatpush1.bf16.msra.mxu0 0
      %1037 = vmatprep.subr.bf16.mxu0 %v1015
      %1038 = vmatpush1.bf16.msra.mxu0 %v1014
      %1039 = vmatprep.subr.bf16.mxu0 0
      %1040 = vmatpush2.bf16.msra.mxu0 0
      %1041 = vmatprep.subr.bf16.mxu0 0
      %1042 = vmatpush2.bf16.msra.mxu0 0
      %1043 = vmatprep.subr.bf16.mxu0 0
      %1044 = vmatpush2.bf16.msra.mxu0 0
      %1045 = vmatprep.subr.bf16.mxu0 0
      %1046 = vmatpush2.bf16.msra.mxu0 0
      %1047 = vmatprep.subr.bf16.mxu0 0
      %1048 = vmatpush2.bf16.msra.mxu0 0
      %1049 = vmatprep.subr.bf16.mxu0 0
      %1050 = vmatpush2.bf16.msra.mxu0 0
      %1051 = vmatprep.subr.bf16.mxu0 0
      %1052 = vmatpush2.bf16.msra.mxu0 0
      %1053 = vmatprep.subr.bf16.mxu0 0
      %1054 = vmatpush2.bf16.msra.mxu0 0
      %1055 = vmatprep.mubr.bf16.mxu0 0
      %1056 = vmatmul.mubr.bf16.gmra.mxu0 %v1021
      %v1057 = vpop.f32.mrf.mxu0
      %v1058 = vadd.f32 0.0, %v1057
      %v1059 = vpop.f32.mrf.mxu0
      %v1060 = vadd.f32 0.0, %v1059
      %v1061 = vpop.f32.mrf.mxu0
      %v1062 = vadd.f32 0.0, %v1061
      %v1063 = vpop.f32.mrf.mxu0
      %v1064 = vadd.f32 0.0, %v1063
      %1065 = vdwg.mxu0
      %1066 = vmatprep.subr.bf16.mxu0 0
      %1067 = vmatpush1.bf16.msra.mxu0 0
      %1068 = vmatprep.subr.bf16.mxu0 0
      %1069 = vmatpush1.bf16.msra.mxu0 0
      %1070 = vmatprep.subr.bf16.mxu0 0
      %1071 = vmatpush1.bf16.msra.mxu0 0
      %1072 = vmatprep.subr.bf16.mxu0 0
      %1073 = vmatpush1.bf16.msra.mxu0 0
      %1074 = vmatprep.subr.bf16.mxu0 0
      %1075 = vmatpush1.bf16.msra.mxu0 0
      %1076 = vmatprep.subr.bf16.mxu0 0
      %1077 = vmatpush1.bf16.msra.mxu0 0
      %1078 = vmatprep.subr.bf16.mxu0 0
      %1079 = vmatpush1.bf16.msra.mxu0 0
      %1080 = vmatprep.subr.bf16.mxu0 0
      %1081 = vmatpush1.bf16.msra.mxu0 %v1016
      %1082 = vmatprep.subr.bf16.mxu0 0
      %1083 = vmatpush2.bf16.msra.mxu0 0
      %1084 = vmatprep.subr.bf16.mxu0 0
      %1085 = vmatpush2.bf16.msra.mxu0 0
      %1086 = vmatprep.subr.bf16.mxu0 0
      %1087 = vmatpush2.bf16.msra.mxu0 0
      %1088 = vmatprep.subr.bf16.mxu0 0
      %1089 = vmatpush2.bf16.msra.mxu0 0
      %1090 = vmatprep.subr.bf16.mxu0 0
      %1091 = vmatpush2.bf16.msra.mxu0 0
      %1092 = vmatprep.subr.bf16.mxu0 0
      %1093 = vmatpush2.bf16.msra.mxu0 0
      %1094 = vmatprep.subr.bf16.mxu0 0
      %1095 = vmatpush2.bf16.msra.mxu0 0
      %1096 = vmatprep.subr.bf16.mxu0 0
      %1097 = vmatpush2.bf16.msra.mxu0 0
      %1098 = vmatprep.mubr.bf16.mxu0 0
      %1099 = vmatmul.mubr.bf16.gmra.mxu0 %v1021
      %v1100 = vpop.f32.mrf.mxu0
      %v1101 = vadd.f32 0.0, %v1100
      %v1102 = vpop.f32.mrf.mxu0
      %v1103 = vpop.f32.mrf.mxu0
      %v1104 = vadd.f32 0.0, %v1103
      %v1105 = vpop.f32.mrf.mxu0
      %1106 = vdwg.mxu0
      %v1107 = vadd.f32 %v991, %v1058
      %v1108 = vadd.f32 %v992, %v1060
      %v1109 = vadd.f32 %v993, %v1101
      %v1110 = vadd.f32 %v994, %v1062
      %v1111 = vadd.f32 %v995, %v1064
      %v1112 = vadd.f32 %v996, %v1104
      %s1113 = scalar_lea.vmem %s0, 64
      %v1114 = vld [vmem:[%s1113] sm:$0xf]
      %v1115 = vld [vmem:[%s1113 + $0x4] sm:$0xf]
      %v1118 = vunpack.c.l.b16 %v1114
      %v1119 = vunpack.c.l.b16 %v1115
      %v1120 = vpack.c.b16 %v1119, %v1118
      %1121 = vrot.lane.b32.xlu0 %v202, 90
      %v1122 = vpop.permute.xlu0 %1121
      %1123 = vrot.lane.b32.xlu0 %v203, 90
      %v1124 = vpop.permute.xlu0 %1123
      %1125 = vrot.lane.b32.xlu0 %v204, 90
      %v1126 = vpop.permute.xlu0 %1125
      %1127 = vrot.lane.b32.xlu0 %v205, 90
      %v1128 = vpop.permute.xlu0 %1127
      %vm1129 = vcmask 736256
      %v1130 = vsel %vm1129, %v1122, %v1124
      %v1131 = vsel %vm1129, %v1124, %v1126
      %v1132 = vsel %vm1129, %v1126, %v1128
      %v1137 = vsel %vm221, %v1120, 0
      %1139 = vmatprep.subr.bf16.mxu0 0
      %1140 = vmatpush1.bf16.msra.mxu0 0
      %1141 = vmatprep.subr.bf16.mxu0 0
      %1142 = vmatpush1.bf16.msra.mxu0 0
      %1143 = vmatprep.subr.bf16.mxu0 0
      %1144 = vmatpush1.bf16.msra.mxu0 0
      %1145 = vmatprep.subr.bf16.mxu0 0
      %1146 = vmatpush1.bf16.msra.mxu0 0
      %1147 = vmatprep.subr.bf16.mxu0 0
      %1148 = vmatpush1.bf16.msra.mxu0 0
      %1149 = vmatprep.subr.bf16.mxu0 0
      %1150 = vmatpush1.bf16.msra.mxu0 0
      %1151 = vmatprep.subr.bf16.mxu0 0
      %1152 = vmatpush1.bf16.msra.mxu0 0
      %1153 = vmatprep.subr.bf16.mxu0 %v1131
      %1154 = vmatpush1.bf16.msra.mxu0 %v1130
      %1155 = vmatprep.subr.bf16.mxu0 0
      %1156 = vmatpush2.bf16.msra.mxu0 0
      %1157 = vmatprep.subr.bf16.mxu0 0
      %1158 = vmatpush2.bf16.msra.mxu0 0
      %1159 = vmatprep.subr.bf16.mxu0 0
      %1160 = vmatpush2.bf16.msra.mxu0 0
      %1161 = vmatprep.subr.bf16.mxu0 0
      %1162 = vmatpush2.bf16.msra.mxu0 0
      %1163 = vmatprep.subr.bf16.mxu0 0
      %1164 = vmatpush2.bf16.msra.mxu0 0
      %1165 = vmatprep.subr.bf16.mxu0 0
      %1166 = vmatpush2.bf16.msra.mxu0 0
      %1167 = vmatprep.subr.bf16.mxu0 0
      %1168 = vmatpush2.bf16.msra.mxu0 0
      %1169 = vmatprep.subr.bf16.mxu0 0
      %1170 = vmatpush2.bf16.msra.mxu0 0
      %1171 = vmatprep.mubr.bf16.mxu0 0
      %1172 = vmatmul.mubr.bf16.gmra.mxu0 %v1137
      %v1173 = vpop.f32.mrf.mxu0
      %v1174 = vadd.f32 0.0, %v1173
      %v1175 = vpop.f32.mrf.mxu0
      %v1176 = vadd.f32 0.0, %v1175
      %v1177 = vpop.f32.mrf.mxu0
      %v1178 = vadd.f32 0.0, %v1177
      %v1179 = vpop.f32.mrf.mxu0
      %v1180 = vadd.f32 0.0, %v1179
      %1181 = vdwg.mxu0
      %1182 = vmatprep.subr.bf16.mxu0 0
      %1183 = vmatpush1.bf16.msra.mxu0 0
      %1184 = vmatprep.subr.bf16.mxu0 0
      %1185 = vmatpush1.bf16.msra.mxu0 0
      %1186 = vmatprep.subr.bf16.mxu0 0
      %1187 = vmatpush1.bf16.msra.mxu0 0
      %1188 = vmatprep.subr.bf16.mxu0 0
      %1189 = vmatpush1.bf16.msra.mxu0 0
      %1190 = vmatprep.subr.bf16.mxu0 0
      %1191 = vmatpush1.bf16.msra.mxu0 0
      %1192 = vmatprep.subr.bf16.mxu0 0
      %1193 = vmatpush1.bf16.msra.mxu0 0
      %1194 = vmatprep.subr.bf16.mxu0 0
      %1195 = vmatpush1.bf16.msra.mxu0 0
      %1196 = vmatprep.subr.bf16.mxu0 0
      %1197 = vmatpush1.bf16.msra.mxu0 %v1132
      %1198 = vmatprep.subr.bf16.mxu0 0
      %1199 = vmatpush2.bf16.msra.mxu0 0
      %1200 = vmatprep.subr.bf16.mxu0 0
      %1201 = vmatpush2.bf16.msra.mxu0 0
      %1202 = vmatprep.subr.bf16.mxu0 0
      %1203 = vmatpush2.bf16.msra.mxu0 0
      %1204 = vmatprep.subr.bf16.mxu0 0
      %1205 = vmatpush2.bf16.msra.mxu0 0
      %1206 = vmatprep.subr.bf16.mxu0 0
      %1207 = vmatpush2.bf16.msra.mxu0 0
      %1208 = vmatprep.subr.bf16.mxu0 0
      %1209 = vmatpush2.bf16.msra.mxu0 0
      %1210 = vmatprep.subr.bf16.mxu0 0
      %1211 = vmatpush2.bf16.msra.mxu0 0
      %1212 = vmatprep.subr.bf16.mxu0 0
      %1213 = vmatpush2.bf16.msra.mxu0 0
      %1214 = vmatprep.mubr.bf16.mxu0 0
      %1215 = vmatmul.mubr.bf16.gmra.mxu0 %v1137
      %v1216 = vpop.f32.mrf.mxu0
      %v1217 = vadd.f32 0.0, %v1216
      %v1218 = vpop.f32.mrf.mxu0
      %v1219 = vpop.f32.mrf.mxu0
      %v1220 = vadd.f32 0.0, %v1219
      %v1221 = vpop.f32.mrf.mxu0
      %1222 = vdwg.mxu0
      %v1223 = vadd.f32 %v1107, %v1174
      %v1224 = vadd.f32 %v1108, %v1176
      %v1225 = vadd.f32 %v1109, %v1217
      %v1226 = vadd.f32 %v1110, %v1178
      %v1227 = vadd.f32 %v1111, %v1180
      %v1228 = vadd.f32 %v1112, %v1220
      %v1229 = vld [vmem:[%s1] sm:$0xff]
      %v1230 = vld [vmem:[%s1 + $0x8] sm:$0xff]
      %1232 = vset.pattern.permute.xlu0 0
      %1233 = vperm.xlu0 %1232, %v1229
      %v1234 = vpop.permute.xlu0 %1233
      %1237 = vset.pattern.permute.xlu0 0
      %1238 = vperm.xlu0 %1237, %v1230
      %v1239 = vpop.permute.xlu0 %1238
      %v1241 = vadd.f32 %v1223, %v1234
      %v1242 = vadd.f32 %v1224, %v1234
      %v1243 = vadd.f32 %v1225, %v1234
      %v1244 = vadd.f32 %v1226, %v1239
      %v1245 = vadd.f32 %v1227, %v1239
      %v1246 = vadd.f32 %v1228, %v1239
      %v1247 = vunpack.c.l.bf16 %v181
      %v1248 = vunpack.c.h.bf16 %v181
      %v1249 = vunpack.c.l.bf16 %v182
      %v1250 = vunpack.c.h.bf16 %v182
      %v1251 = vunpack.c.l.bf16 %v183
      %v1252 = vunpack.c.h.bf16 %v183
      %v1253 = vunpack.c.l.bf16 %v184
      %v1254 = vunpack.c.h.bf16 %v184
      %1263 = vrot.lane.b32.xlu0 %v1247, 109
      %v1264 = vpop.permute.xlu0 %1263
      %1265 = vrot.lane.b32.xlu0 %v1248, 109
      %v1266 = vpop.permute.xlu0 %1265
      %1267 = vrot.lane.b32.xlu0 %v1249, 109
      %v1268 = vpop.permute.xlu0 %1267
      %1269 = vrot.lane.b32.xlu0 %v1250, 109
      %v1270 = vpop.permute.xlu0 %1269
      %1271 = vrot.lane.b32.xlu0 %v1251, 109
      %v1272 = vpop.permute.xlu0 %1271
      %1273 = vrot.lane.b32.xlu0 %v1252, 109
      %v1274 = vpop.permute.xlu0 %1273
      %1275 = vrot.lane.b32.xlu0 %v1253, 109
      %v1276 = vpop.permute.xlu0 %1275
      %1277 = vrot.lane.b32.xlu0 %v1254, 109
      %v1278 = vpop.permute.xlu0 %1277
      %vm1279 = vcmask 891904
      %v1280 = vsel %vm1279, %v1264, %v1266
      %v1281 = vsel %vm1279, %v1266, %v1268
      %v1282 = vsel %vm1279, %v1268, %v1270
      %v1283 = vsel %vm1279, %v1272, %v1274
      %v1284 = vsel %vm1279, %v1274, %v1276
      %v1285 = vsel %vm1279, %v1276, %v1278
      %v1292 = vadd.f32 %v1241, %v1280
      %v1293 = vadd.f32 %v1242, %v1281
      %v1294 = vadd.f32 %v1243, %v1282
      %v1295 = vadd.f32 %v1244, %v1283
      %v1296 = vadd.f32 %v1245, %v1284
      %v1297 = vadd.f32 %v1246, %v1285
      %v1298 = vmax.f32 %v1292, 0.0
      %v1299 = vmax.f32 %v1293, 0.0
      %v1300 = vmax.f32 %v1294, 0.0
      %v1301 = vmax.f32 %v1295, 0.0
      %v1302 = vmax.f32 %v1296, 0.0
      %v1303 = vmax.f32 %v1297, 0.0
      %1304 = vst [vmem:[%s170] sm:$0xff] %v1298
      %1305 = vst [vmem:[%s170 + $0x8] sm:$0xff] %v1299
      %1306 = vst [vmem:[%s170 + $0x10] sm:$0xff] %v1300
      %1307 = vst [vmem:[%s170 + $0x18] sm:$0xff] %v1301
      %1308 = vst [vmem:[%s170 + $0x20] sm:$0xff] %v1302
      %1309 = vst [vmem:[%s170 + $0x28] sm:$0xff] %v1303
      %p1310 = scmp.lt.s32.totalorder %s14, 1
      %s1311 = scalar_select %p1310, %s14, 1
      %s1312 = smul.addr %s1311, 6
      %s1313 = smul.addr %s1312, 8
      %s1314 = scalar_lea.vmem %s3, %s1313
      // Predicated region
      $region33: #{conv2d_bn_relu.1} parent=31 // pred_check
        %p1315 = pneg %p100
      $region34: #{conv2d_bn_relu.1} parent=31 // pred_check_branch
        %1317 = sbr.rel (%p1315) target = $region36
      $region35: #{conv2d_bn_relu.1} parent=31 // pred_region
        _
      $region36: #{conv2d_bn_relu.1} parent=31 // pred_fallthru
        _
    $region32: #{conv2d_bn_relu.1} parent=5 // pred_fallthru
      _
    %p1318 = scmp.le.s32.totalorder 2, %s9
    // Predicated region
    $region37: #{conv2d_bn_relu.1} parent=5 // pred_check
      %p1319 = pneg %p1318
    $region38: #{conv2d_bn_relu.1} parent=5 // pred_check_branch
      %1321 = sbr.rel (%p1319) target = $region40
    $region39: #{conv2d_bn_relu.1} parent=5 // pred_region
      %s1322 = ssub.s32 %s9, 2
      // Predicated region
      $region41: #{conv2d_bn_relu.1} parent=39 // pred_check
        %p1323 = pneg %p106
      $region42: #{conv2d_bn_relu.1} parent=39 // pred_check_branch
        %1325 = sbr.rel (%p1323) target = $region44
      $region43: #{conv2d_bn_relu.1} parent=39 // pred_region
        %p1326 = scmp.lt.s32.totalorder %s15, 1
        %s1327 = scalar_select %p1326, %s15, 1
        %s1328 = smul.addr %s1327, 6
        %s1329 = smul.addr %s1328, 8
        %s1330 = scalar_lea.vmem %s3, %s1329
      $region44: #{conv2d_bn_relu.1} parent=39 // pred_fallthru
        _
    $region40: #{conv2d_bn_relu.1} parent=5 // pred_fallthru
      _
  $region6: #{conv2d_bn_relu.1} parent=0 // loop_footer
    %s13 = sadd.s32 1, %s9
  $region7: #{conv2d_bn_relu.1} parent=0 // loop_footer_branch
    %8 = sbr.rel target = $region3
  $region8: #{conv2d_bn_relu.1} parent=0 // loop_exit
    _

</llo_original>
